<compile_context>
chip_gen: v7x
topology: tpu7x:2x2x1
jax: 0.10.0
libtpu: 0.0.40
codegen_flags: <defaults>
</compile_context>

<pallas_src>
import functools

import jax
import jax.numpy as jnp
from jax.experimental import pallas as pl
from jax.experimental.pallas import tpu as pltpu


def _round_up(x, m):
    return (x + m - 1) // m * m


def _seq_lstm_kernel(x_ref, hprev_ref, cprev_ref, wx0_ref, win_ref, wh_ref,
                     b_ref, h_out_ref, c_out_ref, *, num_layers, h_pad):
    """One grid step == ALL LSTM layers for one batch tile.

    x_ref      : (TB, Dxp)          padded model input (layer 0 only)
    hprev_ref  : (L, TB, Hp)        previous hidden states (all layers)
    cprev_ref  : (L, TB, Hp)        previous cell states (all layers)
    wx0_ref    : (Dxp, 4*Hp)        layer-0 input weights (VMEM resident)
    win_ref    : (max(L-1,1), Hp, 4*Hp)  layer>=1 input weights (resident)
    wh_ref     : (L, Hp, 4*Hp)      recurrent weights (resident)
    b_ref      : (L, 1, 4*Hp)       biases (resident)
    h_out_ref  : (L, TB, Hp)
    c_out_ref  : (L, TB, Hp)
    """
    mm_dtype = wx0_ref.dtype          # bf16 or f32 matmul operands
    layer_in = None                   # (TB, Hp) carry, next layer's input

    for l in range(num_layers):       # static unroll: L is small (RNNG uses 1-2)
        c_prev = cprev_ref[l].astype(jnp.float32)

        # Two dots instead of concat + one K=Dxp+Hp dot (no copy, no dead K).
        if l == 0:
            gates = jnp.dot(x_ref[...].astype(mm_dtype), wx0_ref[...],
                            preferred_element_type=jnp.float32)
        else:
            gates = jnp.dot(layer_in, win_ref[l - 1],
                            preferred_element_type=jnp.float32)
        gates = gates + jnp.dot(hprev_ref[l].astype(mm_dtype), wh_ref[l],
                                preferred_element_type=jnp.float32)
        gates = gates + b_ref[l].astype(jnp.float32)

        # Lane-aligned gate blocks (i, f, o, g order as in the PyTorch split).
        i = gates[:, 0 * h_pad:1 * h_pad]
        f = gates[:, 1 * h_pad:2 * h_pad]
        o = gates[:, 2 * h_pad:3 * h_pad]
        g = gates[:, 3 * h_pad:4 * h_pad]

        c = jax.nn.sigmoid(f) * c_prev + jax.nn.sigmoid(i) * jnp.tanh(g)
        h = jax.nn.sigmoid(o) * jnp.tanh(c)

        h_out_ref[l] = h.astype(h_out_ref.dtype)
        c_out_ref[l] = c.astype(c_out_ref.dtype)
        layer_in = h.astype(mm_dtype)


def _seq_lstm_forward(x_p, h_p, c_p, wx0, w_in, w_hh, b_stack, *, h_pad, tb):
    bp, dxp = x_p.shape
    num_layers = w_hh.shape[0]
    four_hp = 4 * h_pad
    nb = bp // tb

    grid_spec = pltpu.PrefetchScalarGridSpec(
        num_scalar_prefetch=0,
        grid=(nb,),
        in_specs=[
            pl.BlockSpec((tb, dxp), lambda b: (b, 0)),                   # x tile
            pl.BlockSpec((num_layers, tb, h_pad), lambda b: (0, b, 0)),  # h_prev
            pl.BlockSpec((num_layers, tb, h_pad), lambda b: (0, b, 0)),  # c_prev
            pl.BlockSpec((dxp, four_hp), lambda b: (0, 0)),              # W_x (l=0), resident
            pl.BlockSpec((w_in.shape[0], h_pad, four_hp),
                         lambda b: (0, 0, 0)),                           # W_in (l>=1), resident
            pl.BlockSpec((num_layers, h_pad, four_hp),
                         lambda b: (0, 0, 0)),                           # W_hh, resident
            pl.BlockSpec((num_layers, 1, four_hp), lambda b: (0, 0, 0)), # bias, resident
        ],
        out_specs=(
            pl.BlockSpec((num_layers, tb, h_pad), lambda b: (0, b, 0)),  # h
            pl.BlockSpec((num_layers, tb, h_pad), lambda b: (0, b, 0)),  # c
        ),
    )

    w_bytes = (wx0.size + w_in.size + w_hh.size + b_stack.size) * jnp.dtype(wx0.dtype).itemsize
    a_bytes = jnp.dtype(x_p.dtype).itemsize
    state_bytes = (x_p.size + 2 * h_p.size + 2 * c_p.size) * a_bytes
    flops = 2 * bp * four_hp * (dxp + h_pad + (num_layers - 1) * 2 * h_pad)
    cost = pl.CostEstimate(flops=flops,
                           transcendentals=5 * num_layers * bp * h_pad,
                           bytes_accessed=w_bytes + state_bytes)

    # Rough per-tile VMEM footprint (x2 for default double-buffering), clamped
    # to the v7x physical 64 MiB so the explicit limit is safe on every gen.
    tile_bytes = 2 * (tb * dxp + 4 * num_layers * tb * h_pad) * a_bytes + 2 * w_bytes
    vmem_limit = int(min(64 << 20, max(32 << 20, 2 * tile_bytes)))

    return pl.pallas_call(
        functools.partial(_seq_lstm_kernel, num_layers=num_layers, h_pad=h_pad),
        out_shape=(
            jax.ShapeDtypeStruct((num_layers, bp, h_pad), x_p.dtype),
            jax.ShapeDtypeStruct((num_layers, bp, h_pad), x_p.dtype),
        ),
        grid_spec=grid_spec,
        compiler_params=pltpu.CompilerParams(
            dimension_semantics=("parallel",),   # batch tiles shard across TCs (v7x)
            vmem_limit_bytes=vmem_limit),
        cost_estimate=cost,
        # In-place state update: prev-h/prev-c stacks become the h/c outputs.
        input_output_aliases={1: 0, 2: 1},
    )(x_p, h_p, c_p, wx0, w_in, w_hh, b_stack)


class SeqLSTMPallas:
    """Mirror of the PyTorch SeqLSTM module (forward pass, eval mode)."""

    def __init__(self, i_dim=200, h_dim=0, num_layers=1, dropout=0.0, key=None,
                 param_dtype=jnp.float32):
        self.i_dim = i_dim
        self.h_dim = h_dim
        self.num_layers = num_layers
        self.dropout = dropout
        self.param_dtype = param_dtype
        if key is None:
            key = jax.random.PRNGKey(0)

        # Raw PyTorch-layout parameters (kept f32 for the pure-JAX reference).
        self.weights, self.biases = [], []
        for l in range(num_layers):
            in_features = (h_dim + i_dim) if l == 0 else (h_dim * 2)
            out_features = h_dim * 4
            key, kw, kb = jax.random.split(key, 3)
            bound = 1.0 / float(in_features) ** 0.5
            w = jax.random.uniform(kw, (out_features, in_features),
                                   dtype=jnp.float32, minval=-bound, maxval=bound)
            b = jax.random.uniform(kb, (out_features,),
                                   dtype=jnp.float32, minval=-bound, maxval=bound)
            self.weights.append(w)
            self.biases.append(b)

        # ---- Precompute padded / split / stacked kernel parameters ONCE. ----
        H = h_dim
        self.h_pad = _round_up(H, 128)            # Hp: lane-aligned gate width
        self.dx_pad = _round_up(i_dim, 128)       # Dxp: only layer-0 input width
        Hp, Dxp = self.h_pad, self.dx_pad

        wx0 = jnp.zeros((Dxp, 4 * Hp), jnp.float32)
        win = jnp.zeros((max(num_layers - 1, 1), Hp, 4 * Hp), jnp.float32)
        whh = jnp.zeros((num_layers, Hp, 4 * Hp), jnp.float32)
        bst = jnp.zeros((num_layers, 1, 4 * Hp), jnp.float32)
        for l in range(num_layers):
            d_in = i_dim if l == 0 else h_dim
            wt = jnp.transpose(self.weights[l])   # (d_in + H, 4H); concat is [input, h]
            w_in_l, w_h_l = wt[:d_in, :], wt[d_in:, :]
            for gate in range(4):
                src = slice(gate * H, (gate + 1) * H)
                dst = slice(gate * Hp, gate * Hp + H)
                if l == 0:
                    wx0 = wx0.at[:d_in, dst].set(w_in_l[:, src])
                else:
                    win = win.at[l - 1, :d_in, dst].set(w_in_l[:, src])
                whh = whh.at[l, :H, dst].set(w_h_l[:, src])
                bst = bst.at[l, 0, dst].set(self.biases[l][src])
        # Matmul operands in param_dtype (bf16 halves DMA/VMEM, ~2-3x MXU on
        # v6e/v7x); gate math in the kernel stays f32.
        self.wx0 = wx0.astype(param_dtype)
        self.w_in = win.astype(param_dtype)
        self.w_hh = whh.astype(param_dtype)
        self.b_stack = bst.astype(param_dtype)

    # ---- Padded-state API (for multi-timestep callers: zero-copy aliasing) ----
    def _batch_tile(self, B):
        if B <= 128:
            bp = _round_up(max(B, 1), 8)
            return bp, bp
        tb = 128                                   # nb >= 2 -> shards across v7x cores
        return _round_up(B, tb), tb

    def init_state(self, B, dtype=jnp.float32):
        bp, _ = self._batch_tile(B)
        z = jnp.zeros((self.num_layers, bp, self.h_pad), dtype)
        return z, z

    def step_padded(self, x_p, h_p, c_p, tb):
        return _seq_lstm_forward(x_p, h_p, c_p, self.wx0, self.w_in, self.w_hh,
                                 self.b_stack, h_pad=self.h_pad, tb=tb)

    # ---- Drop-in forward (pads in / slices out, like the PyTorch module) ----
    def __call__(self, x, prev_h=None):
        B = x.shape[0]
        H, L = self.h_dim, self.num_layers
        Hp, Dxp = self.h_pad, self.dx_pad
        dtype = x.dtype

        Bp, tb = self._batch_tile(B)
        x_p = jnp.zeros((Bp, Dxp), dtype).at[:B, :self.i_dim].set(x)
        h_p = jnp.zeros((L, Bp, Hp), dtype)
        c_p = jnp.zeros((L, Bp, Hp), dtype)
        if prev_h is not None:
            h_p = h_p.at[:, :B, :H].set(jnp.stack([h for h, _ in prev_h]))
            c_p = c_p.at[:, :B, :H].set(jnp.stack([c for _, c in prev_h]))

        h_out, c_out = self.step_padded(x_p, h_p, c_p, tb)
        return [(h_out[l, :B, :H], c_out[l, :B, :H]) for l in range(L)]


def _reference(model, x, prev_h=None):
    """Pure-JAX reference matching the PyTorch forward (eval mode, f32 weights)."""
    B = x.shape[0]
    H = model.h_dim
    if prev_h is None:
        prev_h = [(jnp.zeros((B, H), x.dtype), jnp.zeros((B, H), x.dtype))
                  for _ in range(model.num_layers)]
    curr_h = []
    for l in range(model.num_layers):
        inp = x if l == 0 else curr_h[l - 1][0]
        concat = jnp.concatenate([inp, prev_h[l][0]], axis=1)
        all_sum = concat @ model.weights[l].T + model.biases[l]
        i, f, o, g = (all_sum[:, k * H:(k + 1) * H] for k in range(4))
        c = jax.nn.sigmoid(f) * prev_h[l][1] + jax.nn.sigmoid(i) * jnp.tanh(g)
        h = jax.nn.sigmoid(o) * jnp.tanh(c)
        curr_h.append((h, c))
    return curr_h


if __name__ == "__main__":
    # Small shapes consistent with the module: batch=8, i_dim=32, h_dim=32, 2 layers.
    B, I_DIM, H_DIM, L = 8, 32, 32, 2

    key = jax.random.PRNGKey(0)
    k_model, k_x, k_h, k_c = jax.random.split(key, 4)

    model = SeqLSTMPallas(i_dim=I_DIM, h_dim=H_DIM, num_layers=L, key=k_model)

    x = jax.random.normal(k_x, (B, I_DIM), dtype=jnp.float32)
    prev_h = [
        (jax.random.normal(jax.random.fold_in(k_h, l), (B, H_DIM), jnp.float32),
         jax.random.normal(jax.random.fold_in(k_c, l), (B, H_DIM), jnp.float32))
        for l in range(L)
    ]

    # Run with explicit previous state and with default (zeros) state.
    out = model(x, prev_h)
    out0 = model(x, None)
    for h, c in out + out0:
        jax.block_until_ready(h)
        jax.block_until_ready(c)

    # Correctness check against the pure-JAX reference (f32 weights, tight tol).
    ref = _reference(model, x, prev_h)
    ref0 = _reference(model, x, None)
    for (h_k, c_k), (h_r, c_r) in list(zip(out, ref)) + list(zip(out0, ref0)):
        assert jnp.allclose(h_k, h_r, atol=1e-5, rtol=1e-5)
        assert jnp.allclose(c_k, c_r, atol=1e-5, rtol=1e-5)

    # bf16-weight variant (same raw f32 weights via the same key); loose tol.
    model_bf16 = SeqLSTMPallas(i_dim=I_DIM, h_dim=H_DIM, num_layers=L,
                               key=k_model, param_dtype=jnp.bfloat16)
    out_bf16 = model_bf16(x, prev_h)
    for h, c in out_bf16:
        jax.block_until_ready(h)
        jax.block_until_ready(c)
    for (h_k, c_k), (h_r, c_r) in zip(out_bf16, ref):
        assert jnp.allclose(h_k, h_r, atol=5e-2, rtol=5e-2)
        assert jnp.allclose(c_k, c_r, atol=5e-2, rtol=5e-2)

    print("KERNEL_OK")
</pallas_src>

<mosaic_0001>
module attributes {stable_mosaic.version = 11 : i64} {
  func.func @_seq_lstm_kernel(%arg0: i32, %arg1: memref<8x128xf32, #tpu.memory_space<vmem>>, %arg2: memref<2x8x128xf32, #tpu.memory_space<vmem>>, %arg3: memref<2x8x128xf32, #tpu.memory_space<vmem>>, %arg4: memref<128x512xf32, #tpu.memory_space<vmem>>, %arg5: memref<1x128x512xf32, #tpu.memory_space<vmem>>, %arg6: memref<2x128x512xf32, #tpu.memory_space<vmem>>, %arg7: memref<2x1x512xf32, #tpu.memory_space<vmem>>, %arg8: memref<2x8x128xf32, #tpu.memory_space<vmem>>, %arg9: memref<2x8x128xf32, #tpu.memory_space<vmem>>) attributes {dimension_semantics = [#tpu.dimension_semantics<parallel>], iteration_bounds = array<i64: 1>, scalar_prefetch = 0 : i64, scratch_operands = 0 : i64, tpu.core_type = #tpu.core_type<tc>, window_params = [{transform_indices = @transform_0, window_bounds = array<i64: 8, 128>}, {transform_indices = @transform_1, window_bounds = array<i64: 2, 8, 128>}, {transform_indices = @transform_2, window_bounds = array<i64: 2, 8, 128>}, {pipeline_mode = #tpu.pipeline_mode<synchronous>, transform_indices = @transform_3, window_bounds = array<i64: 128, 512>}, {pipeline_mode = #tpu.pipeline_mode<synchronous>, transform_indices = @transform_4, window_bounds = array<i64: 1, 128, 512>}, {pipeline_mode = #tpu.pipeline_mode<synchronous>, transform_indices = @transform_5, window_bounds = array<i64: 2, 128, 512>}, {pipeline_mode = #tpu.pipeline_mode<synchronous>, transform_indices = @transform_6, window_bounds = array<i64: 2, 1, 512>}, {transform_indices = @transform_7, window_bounds = array<i64: 2, 8, 128>}, {transform_indices = @transform_8, window_bounds = array<i64: 2, 8, 128>}]} {
    %c0 = arith.constant 0 : index
    %c0_0 = arith.constant 0 : index
    %c0_1 = arith.constant 0 : index
    %0 = vector.load %arg3[%c0, %c0_0, %c0_1] : memref<2x8x128xf32, #tpu.memory_space<vmem>>, vector<1x8x128xf32>
    %1 = vector.shape_cast %0 : vector<1x8x128xf32> to vector<8x128xf32>
    %c0_2 = arith.constant 0 : index
    %c0_3 = arith.constant 0 : index
    %2 = vector.load %arg1[%c0_2, %c0_3] : memref<8x128xf32, #tpu.memory_space<vmem>>, vector<8x128xf32>
    %c0_4 = arith.constant 0 : index
    %c0_5 = arith.constant 0 : index
    %3 = vector.load %arg4[%c0_4, %c0_5] : memref<128x512xf32, #tpu.memory_space<vmem>>, vector<128x512xf32>
    %cst = arith.constant dense<0.000000e+00> : vector<8x512xf32>
    %4 = tpu.matmul %2, %3, %cst {dimension_numbers = #tpu.dot_dimension_numbers<[1], [0], [0], [1], [0, 0, 1, 1], [], []>} : vector<8x128xf32>, vector<128x512xf32>, vector<8x512xf32> -> vector<8x512xf32>
    %c0_6 = arith.constant 0 : index
    %c0_7 = arith.constant 0 : index
    %c0_8 = arith.constant 0 : index
    %5 = vector.load %arg2[%c0_6, %c0_7, %c0_8] : memref<2x8x128xf32, #tpu.memory_space<vmem>>, vector<1x8x128xf32>
    %6 = vector.shape_cast %5 : vector<1x8x128xf32> to vector<8x128xf32>
    %c0_9 = arith.constant 0 : index
    %c0_10 = arith.constant 0 : index
    %c0_11 = arith.constant 0 : index
    %7 = vector.load %arg6[%c0_9, %c0_10, %c0_11] : memref<2x128x512xf32, #tpu.memory_space<vmem>>, vector<1x128x512xf32>
    %8 = vector.shape_cast %7 : vector<1x128x512xf32> to vector<128x512xf32>
    %cst_12 = arith.constant dense<0.000000e+00> : vector<8x512xf32>
    %9 = tpu.matmul %6, %8, %cst_12 {dimension_numbers = #tpu.dot_dimension_numbers<[1], [0], [0], [1], [0, 0, 1, 1], [], []>} : vector<8x128xf32>, vector<128x512xf32>, vector<8x512xf32> -> vector<8x512xf32>
    %10 = arith.addf %4, %9 : vector<8x512xf32>
    %c0_13 = arith.constant 0 : index
    %c0_14 = arith.constant 0 : index
    %c0_15 = arith.constant 0 : index
    %11 = vector.load %arg7[%c0_13, %c0_14, %c0_15] : memref<2x1x512xf32, #tpu.memory_space<vmem>>, vector<1x1x512xf32>
    %12 = vector.shape_cast %11 : vector<1x1x512xf32> to vector<1x512xf32>
    %13 = vector.broadcast %12 : vector<1x512xf32> to vector<8x512xf32>
    %14 = arith.addf %10, %13 : vector<8x512xf32>
    %15 = vector.extract_strided_slice %14 {offsets = [0, 0], sizes = [8, 128], strides = [1, 1]} : vector<8x512xf32> to vector<8x128xf32>
    %16 = vector.extract_strided_slice %14 {offsets = [0, 128], sizes = [8, 128], strides = [1, 1]} : vector<8x512xf32> to vector<8x128xf32>
    %17 = vector.extract_strided_slice %14 {offsets = [0, 256], sizes = [8, 128], strides = [1, 1]} : vector<8x512xf32> to vector<8x128xf32>
    %18 = vector.extract_strided_slice %14 {offsets = [0, 384], sizes = [8, 128], strides = [1, 1]} : vector<8x512xf32> to vector<8x128xf32>
    %19 = arith.negf %16 : vector<8x128xf32>
    %20 = math.exp %19 : vector<8x128xf32>
    %cst_16 = arith.constant 1.000000e+00 : f32
    %21 = vector.broadcast %cst_16 : f32 to vector<8x128xf32>
    %22 = arith.addf %21, %20 : vector<8x128xf32>
    %23 = arith.divf %21, %22 : vector<8x128xf32>
    %24 = arith.mulf %23, %1 : vector<8x128xf32>
    %25 = arith.negf %15 : vector<8x128xf32>
    %26 = math.exp %25 : vector<8x128xf32>
    %cst_17 = arith.constant 1.000000e+00 : f32
    %27 = vector.broadcast %cst_17 : f32 to vector<8x128xf32>
    %28 = arith.addf %27, %26 : vector<8x128xf32>
    %29 = arith.divf %27, %28 : vector<8x128xf32>
    %30 = math.tanh %18 : vector<8x128xf32>
    %31 = arith.mulf %29, %30 : vector<8x128xf32>
    %32 = arith.addf %24, %31 : vector<8x128xf32>
    %33 = arith.negf %17 : vector<8x128xf32>
    %34 = math.exp %33 : vector<8x128xf32>
    %cst_18 = arith.constant 1.000000e+00 : f32
    %35 = vector.broadcast %cst_18 : f32 to vector<8x128xf32>
    %36 = arith.addf %35, %34 : vector<8x128xf32>
    %37 = arith.divf %35, %36 : vector<8x128xf32>
    %38 = math.tanh %32 : vector<8x128xf32>
    %39 = arith.mulf %37, %38 : vector<8x128xf32>
    %c0_19 = arith.constant 0 : index
    %c0_20 = arith.constant 0 : index
    %c0_21 = arith.constant 0 : index
    %40 = vector.load %arg8[%c0_19, %c0_20, %c0_21] : memref<2x8x128xf32, #tpu.memory_space<vmem>>, vector<1x8x128xf32>
    %41 = vector.shape_cast %40 : vector<1x8x128xf32> to vector<8x128xf32>
    %42 = vector.shape_cast %39 : vector<8x128xf32> to vector<1x8x128xf32>
    tpu.vector_store %arg8[%c0_19, %c0_20, %c0_21], %42 {strides = array<i32>} : memref<2x8x128xf32, #tpu.memory_space<vmem>>, vector<1x8x128xf32>,
    %c0_22 = arith.constant 0 : index
    %c0_23 = arith.constant 0 : index
    %c0_24 = arith.constant 0 : index
    %43 = vector.load %arg9[%c0_22, %c0_23, %c0_24] : memref<2x8x128xf32, #tpu.memory_space<vmem>>, vector<1x8x128xf32>
    %44 = vector.shape_cast %43 : vector<1x8x128xf32> to vector<8x128xf32>
    %45 = vector.shape_cast %32 : vector<8x128xf32> to vector<1x8x128xf32>
    tpu.vector_store %arg9[%c0_22, %c0_23, %c0_24], %45 {strides = array<i32>} : memref<2x8x128xf32, #tpu.memory_space<vmem>>, vector<1x8x128xf32>,
    %c1 = arith.constant 1 : index
    %c0_25 = arith.constant 0 : index
    %c0_26 = arith.constant 0 : index
    %46 = vector.load %arg3[%c1, %c0_25, %c0_26] : memref<2x8x128xf32, #tpu.memory_space<vmem>>, vector<1x8x128xf32>
    %47 = vector.shape_cast %46 : vector<1x8x128xf32> to vector<8x128xf32>
    %c0_27 = arith.constant 0 : index
    %c0_28 = arith.constant 0 : index
    %c0_29 = arith.constant 0 : index
    %48 = vector.load %arg5[%c0_27, %c0_28, %c0_29] : memref<1x128x512xf32, #tpu.memory_space<vmem>>, vector<1x128x512xf32>
    %49 = vector.shape_cast %48 : vector<1x128x512xf32> to vector<128x512xf32>
    %cst_30 = arith.constant dense<0.000000e+00> : vector<8x512xf32>
    %50 = tpu.matmul %39, %49, %cst_30 {dimension_numbers = #tpu.dot_dimension_numbers<[1], [0], [0], [1], [0, 0, 1, 1], [], []>} : vector<8x128xf32>, vector<128x512xf32>, vector<8x512xf32> -> vector<8x512xf32>
    %c1_31 = arith.constant 1 : index
    %c0_32 = arith.constant 0 : index
    %c0_33 = arith.constant 0 : index
    %51 = vector.load %arg2[%c1_31, %c0_32, %c0_33] : memref<2x8x128xf32, #tpu.memory_space<vmem>>, vector<1x8x128xf32>
    %52 = vector.shape_cast %51 : vector<1x8x128xf32> to vector<8x128xf32>
    %c1_34 = arith.constant 1 : index
    %c0_35 = arith.constant 0 : index
    %c0_36 = arith.constant 0 : index
    %53 = vector.load %arg6[%c1_34, %c0_35, %c0_36] : memref<2x128x512xf32, #tpu.memory_space<vmem>>, vector<1x128x512xf32>
    %54 = vector.shape_cast %53 : vector<1x128x512xf32> to vector<128x512xf32>
    %cst_37 = arith.constant dense<0.000000e+00> : vector<8x512xf32>
    %55 = tpu.matmul %52, %54, %cst_37 {dimension_numbers = #tpu.dot_dimension_numbers<[1], [0], [0], [1], [0, 0, 1, 1], [], []>} : vector<8x128xf32>, vector<128x512xf32>, vector<8x512xf32> -> vector<8x512xf32>
    %56 = arith.addf %50, %55 : vector<8x512xf32>
    %c1_38 = arith.constant 1 : index
    %c0_39 = arith.constant 0 : index
    %c0_40 = arith.constant 0 : index
    %57 = vector.load %arg7[%c1_38, %c0_39, %c0_40] : memref<2x1x512xf32, #tpu.memory_space<vmem>>, vector<1x1x512xf32>
    %58 = vector.shape_cast %57 : vector<1x1x512xf32> to vector<1x512xf32>
    %59 = vector.broadcast %58 : vector<1x512xf32> to vector<8x512xf32>
    %60 = arith.addf %56, %59 : vector<8x512xf32>
    %61 = vector.extract_strided_slice %60 {offsets = [0, 0], sizes = [8, 128], strides = [1, 1]} : vector<8x512xf32> to vector<8x128xf32>
    %62 = vector.extract_strided_slice %60 {offsets = [0, 128], sizes = [8, 128], strides = [1, 1]} : vector<8x512xf32> to vector<8x128xf32>
    %63 = vector.extract_strided_slice %60 {offsets = [0, 256], sizes = [8, 128], strides = [1, 1]} : vector<8x512xf32> to vector<8x128xf32>
    %64 = vector.extract_strided_slice %60 {offsets = [0, 384], sizes = [8, 128], strides = [1, 1]} : vector<8x512xf32> to vector<8x128xf32>
    %65 = arith.negf %62 : vector<8x128xf32>
    %66 = math.exp %65 : vector<8x128xf32>
    %cst_41 = arith.constant 1.000000e+00 : f32
    %67 = vector.broadcast %cst_41 : f32 to vector<8x128xf32>
    %68 = arith.addf %67, %66 : vector<8x128xf32>
    %69 = arith.divf %67, %68 : vector<8x128xf32>
    %70 = arith.mulf %69, %47 : vector<8x128xf32>
    %71 = arith.negf %61 : vector<8x128xf32>
    %72 = math.exp %71 : vector<8x128xf32>
    %cst_42 = arith.constant 1.000000e+00 : f32
    %73 = vector.broadcast %cst_42 : f32 to vector<8x128xf32>
    %74 = arith.addf %73, %72 : vector<8x128xf32>
    %75 = arith.divf %73, %74 : vector<8x128xf32>
    %76 = math.tanh %64 : vector<8x128xf32>
    %77 = arith.mulf %75, %76 : vector<8x128xf32>
    %78 = arith.addf %70, %77 : vector<8x128xf32>
    %79 = arith.negf %63 : vector<8x128xf32>
    %80 = math.exp %79 : vector<8x128xf32>
    %cst_43 = arith.constant 1.000000e+00 : f32
    %81 = vector.broadcast %cst_43 : f32 to vector<8x128xf32>
    %82 = arith.addf %81, %80 : vector<8x128xf32>
    %83 = arith.divf %81, %82 : vector<8x128xf32>
    %84 = math.tanh %78 : vector<8x128xf32>
    %85 = arith.mulf %83, %84 : vector<8x128xf32>
    %c1_44 = arith.constant 1 : index
    %c0_45 = arith.constant 0 : index
    %c0_46 = arith.constant 0 : index
    %86 = vector.load %arg8[%c1_44, %c0_45, %c0_46] : memref<2x8x128xf32, #tpu.memory_space<vmem>>, vector<1x8x128xf32>
    %87 = vector.shape_cast %86 : vector<1x8x128xf32> to vector<8x128xf32>
    %88 = vector.shape_cast %85 : vector<8x128xf32> to vector<1x8x128xf32>
    tpu.vector_store %arg8[%c1_44, %c0_45, %c0_46], %88 {strides = array<i32>} : memref<2x8x128xf32, #tpu.memory_space<vmem>>, vector<1x8x128xf32>,
    %c1_47 = arith.constant 1 : index
    %c0_48 = arith.constant 0 : index
    %c0_49 = arith.constant 0 : index
    %89 = vector.load %arg9[%c1_47, %c0_48, %c0_49] : memref<2x8x128xf32, #tpu.memory_space<vmem>>, vector<1x8x128xf32>
    %90 = vector.shape_cast %89 : vector<1x8x128xf32> to vector<8x128xf32>
    %91 = vector.shape_cast %78 : vector<8x128xf32> to vector<1x8x128xf32>
    tpu.vector_store %arg9[%c1_47, %c0_48, %c0_49], %91 {strides = array<i32>} : memref<2x8x128xf32, #tpu.memory_space<vmem>>, vector<1x8x128xf32>,
    return
  }
  func.func @transform_0(%arg0: i32) -> (i32, i32) {
    %c0_i32 = arith.constant 0 : i32
    %c0_i32_0 = arith.constant 0 : i32
    return %arg0, %c0_i32 : i32, i32
  }
  func.func @transform_1(%arg0: i32) -> (i32, i32, i32) {
    %c0_i32 = arith.constant 0 : i32
    %c0_i32_0 = arith.constant 0 : i32
    %c0_i32_1 = arith.constant 0 : i32
    return %c0_i32, %arg0, %c0_i32_0 : i32, i32, i32
  }
  func.func @transform_2(%arg0: i32) -> (i32, i32, i32) {
    %c0_i32 = arith.constant 0 : i32
    %c0_i32_0 = arith.constant 0 : i32
    %c0_i32_1 = arith.constant 0 : i32
    return %c0_i32, %arg0, %c0_i32_0 : i32, i32, i32
  }
  func.func @transform_3(%arg0: i32) -> (i32, i32) {
    %c0_i32 = arith.constant 0 : i32
    %c0_i32_0 = arith.constant 0 : i32
    %c0_i32_1 = arith.constant 0 : i32
    return %c0_i32, %c0_i32_0 : i32, i32
  }
  func.func @transform_4(%arg0: i32) -> (i32, i32, i32) {
    %c0_i32 = arith.constant 0 : i32
    %c0_i32_0 = arith.constant 0 : i32
    %c0_i32_1 = arith.constant 0 : i32
    %c0_i32_2 = arith.constant 0 : i32
    return %c0_i32, %c0_i32_0, %c0_i32_1 : i32, i32, i32
  }
  func.func @transform_5(%arg0: i32) -> (i32, i32, i32) {
    %c0_i32 = arith.constant 0 : i32
    %c0_i32_0 = arith.constant 0 : i32
    %c0_i32_1 = arith.constant 0 : i32
    %c0_i32_2 = arith.constant 0 : i32
    return %c0_i32, %c0_i32_0, %c0_i32_1 : i32, i32, i32
  }
  func.func @transform_6(%arg0: i32) -> (i32, i32, i32) {
    %c0_i32 = arith.constant 0 : i32
    %c0_i32_0 = arith.constant 0 : i32
    %c0_i32_1 = arith.constant 0 : i32
    %c0_i32_2 = arith.constant 0 : i32
    return %c0_i32, %c0_i32_0, %c0_i32_1 : i32, i32, i32
  }
  func.func @transform_7(%arg0: i32) -> (i32, i32, i32) {
    %c0_i32 = arith.constant 0 : i32
    %c0_i32_0 = arith.constant 0 : i32
    %c0_i32_1 = arith.constant 0 : i32
    return %c0_i32, %arg0, %c0_i32_0 : i32, i32, i32
  }
  func.func @transform_8(%arg0: i32) -> (i32, i32, i32) {
    %c0_i32 = arith.constant 0 : i32
    %c0_i32_0 = arith.constant 0 : i32
    %c0_i32_1 = arith.constant 0 : i32
    return %c0_i32, %arg0, %c0_i32_0 : i32, i32, i32
  }
}

</mosaic_0001>

<llo_original>
// kernel: tpu_custom_call.1
$region0: #{tpu_custom_call.1}
  #allocation0 [shape = 'u32[]', space=smem, size = 0x4, offset = 0x4, fixed_abs, tag = 'smem constant byte address 0x4 - core index']
  #allocation1 [shape = 'u32[144,128]{1,0:T(1,128)}', space=vmem, size = 0x12000, scoped, tag = 'internal scratch']
  %s0 = inlined_call_operand.vmem [shape: f32[8,128], index: 0, kind: input, shape index: {}]
  %s1 = inlined_call_operand.hbm [shape: f32[2,8,128], index: 1, kind: input, shape index: {}, may-alias: {1,7}]
  %s2 = inlined_call_operand.hbm [shape: f32[2,8,128], index: 2, kind: input, shape index: {}, may-alias: {2,8}]
  %s3 = inlined_call_operand.hbm [shape: f32[128,512], index: 3, kind: input, shape index: {}]
  %s4 = inlined_call_operand.hbm [shape: f32[1,128,512], index: 4, kind: input, shape index: {}]
  %s5 = inlined_call_operand.hbm [shape: f32[2,128,512], index: 5, kind: input, shape index: {}]
  %s6 = inlined_call_operand.vmem [shape: f32[2,1,512], index: 6, kind: input, shape index: {}]
  %s7 = inlined_call_operand.hbm [shape: f32[2,8,128], index: 7, kind: output, shape index: {0}, may-alias: {1,7}]
  %s8 = inlined_call_operand.hbm [shape: f32[2,8,128], index: 8, kind: output, shape index: {1}, may-alias: {2,8}]
  %9 = xla_tuple %s7, %s8
  %s10 = sld [smem:[#allocation0]]
  $region66: #{tpu_custom_call.1} parent=0
    _
  %s12 = ssub.s32 1, %s10
  %s13 = scalar_select 0, %s12, %s10
  $region1: #{tpu_custom_call.1} parent=0
    #allocation2 [shape = 'u8[8192]{0}', space=vmem, size = 0x2000, scoped, tag = 'input window, operand 1, single buffered']
    #allocation3 [shape = 's32[1]{0}', space=sflag, size = 0x4, scoped, tag = 'scoped memory for tpu_custom_call.1']
    #allocation4 [shape = 's32[1]{0}', space=sflag, size = 0x4, scoped, tag = 'scoped memory for tpu_custom_call.1']
    #allocation5 [shape = 'u8[8192]{0}', space=vmem, size = 0x2000, scoped, tag = 'input window, operand 2, single buffered']
    #allocation6 [shape = 's32[1]{0}', space=sflag, size = 0x4, scoped, tag = 'scoped memory for tpu_custom_call.1']
    #allocation7 [shape = 'u8[262144]{0}', space=vmem, size = 0x40000, scoped, tag = 'input window, operand 3, single buffered']
    #allocation8 [shape = 'u8[262144]{0}', space=vmem, size = 0x40000, scoped, tag = 'input window, operand 4, single buffered']
    #allocation9 [shape = 's32[1]{0}', space=sflag, size = 0x4, scoped, tag = 'scoped memory for tpu_custom_call.1']
    #allocation10 [shape = 'u8[524288]{0}', space=vmem, size = 0x80000, scoped, tag = 'input window, operand 5, single buffered']
    #allocation11 [shape = 'u8[8192]{0}', space=vmem, size = 0x2000, scoped, tag = 'output window, operand 0, single buffered']
    #allocation12 [shape = 'u8[8192]{0}', space=vmem, size = 0x2000, scoped, tag = 'output window, operand 1, single buffered']
    #allocation13 [shape = 's32[1]{0}', space=sflag, size = 0x4, scoped, tag = 'scoped memory for tpu_custom_call.1']
    %14 = vsyncpa [#allocation3], 0
    %15 = vsyncpa [#allocation6], 0
    %16 = vsyncpa [#allocation9], 0
    %17 = vsyncpa [#allocation4], 0
    %18 = vsyncpa [#allocation13], 0
    // Predicated region
    $region2: #{tpu_custom_call.1} parent=1 // pred_check
      _
    $region3: #{tpu_custom_call.1} parent=1 // pred_check_branch
      %20 = sbr.rel (0) target = $region5
    $region4: #{tpu_custom_call.1} parent=1 // pred_region
      _
    $region5: #{tpu_custom_call.1} parent=1 // pred_fallthru
      _
    // Predicated region
    $region6: #{tpu_custom_call.1} parent=1 // pred_check
      _
    $region7: #{tpu_custom_call.1} parent=1 // pred_check_branch
      %22 = sbr.rel (0) target = $region9
    $region8: #{tpu_custom_call.1} parent=1 // pred_region
      %s24 = ssub.s32 256, 256
      %25 = vsyncadd [#allocation3], %s24
      %s26 = sshll.u32 [#allocation2], 4
      %s27 = int_to_ptr.vmem [resolvable:$true] %s26
      %32 = dma.hbm_to_vmem [thread:$0]  %s1, 256, %s27, [#allocation3], 128, 128, 8
    $region9: #{tpu_custom_call.1} parent=1 // pred_fallthru
      _
    // Predicated region
    $region10: #{tpu_custom_call.1} parent=1 // pred_check
      _
    $region11: #{tpu_custom_call.1} parent=1 // pred_check_branch
      %34 = sbr.rel (0) target = $region13
    $region12: #{tpu_custom_call.1} parent=1 // pred_region
      %s36 = ssub.s32 256, 256
      %37 = vsyncadd [#allocation6], %s36
      %s38 = sshll.u32 [#allocation5], 4
      %s39 = int_to_ptr.vmem [resolvable:$true] %s38
      %44 = dma.hbm_to_vmem [thread:$0]  %s2, 256, %s39, [#allocation6], 128, 128, 8
    $region13: #{tpu_custom_call.1} parent=1 // pred_fallthru
      _
    // Predicated region
    $region14: #{tpu_custom_call.1} parent=1 // pred_check
      _
    $region15: #{tpu_custom_call.1} parent=1 // pred_check_branch
      %46 = sbr.rel (0) target = $region17
    $region16: #{tpu_custom_call.1} parent=1 // pred_region
      %s48 = ssub.s32 8192, 8192
      %49 = vsyncadd [#allocation6], %s48
      %s50 = sshll.u32 [#allocation7], 4
      %s51 = int_to_ptr.vmem [resolvable:$true] %s50
      %56 = dma.hbm_to_vmem [thread:$0]  %s3, 8192, %s51, [#allocation6], 512, 512, 32
    $region17: #{tpu_custom_call.1} parent=1 // pred_fallthru
      _
    // Predicated region
    $region18: #{tpu_custom_call.1} parent=1 // pred_check
      _
    $region19: #{tpu_custom_call.1} parent=1 // pred_check_branch
      %58 = sbr.rel (0) target = $region21
    $region20: #{tpu_custom_call.1} parent=1 // pred_region
      %s60 = ssub.s32 8192, 8192
      %61 = vsyncadd [#allocation9], %s60
      %s62 = sshll.u32 [#allocation8], 4
      %s63 = int_to_ptr.vmem [resolvable:$true] %s62
      %68 = dma.hbm_to_vmem [thread:$0]  %s4, 8192, %s63, [#allocation9], 512, 512, 32
    $region21: #{tpu_custom_call.1} parent=1 // pred_fallthru
      _
    // Predicated region
    $region22: #{tpu_custom_call.1} parent=1 // pred_check
      _
    $region23: #{tpu_custom_call.1} parent=1 // pred_check_branch
      %70 = sbr.rel (0) target = $region25
    $region24: #{tpu_custom_call.1} parent=1 // pred_region
      %s72 = ssub.s32 16384, 16384
      %73 = vsyncadd [#allocation9], %s72
      %s74 = sshll.u32 [#allocation10], 4
      %s75 = int_to_ptr.vmem [resolvable:$true] %s74
      %80 = dma.hbm_to_vmem [thread:$0]  %s5, 16384, %s75, [#allocation9], 512, 512, 32
    $region25: #{tpu_custom_call.1} parent=1 // pred_fallthru
      _
    // Predicated region
    $region26: #{tpu_custom_call.1} parent=1 // pred_check
      _
    $region27: #{tpu_custom_call.1} parent=1 // pred_check_branch
      %82 = sbr.rel (0) target = $region29
    $region28: #{tpu_custom_call.1} parent=1 // pred_region
      _
    $region29: #{tpu_custom_call.1} parent=1 // pred_fallthru
      _
    // Predicated region
    $region30: #{tpu_custom_call.1} parent=1 // pred_check
      _
    $region31: #{tpu_custom_call.1} parent=1 // pred_check_branch
      %84 = sbr.rel (0) target = $region33
    $region32: #{tpu_custom_call.1} parent=1 // pred_region
      %85 = dma.done [#allocation3], 256
    $region33: #{tpu_custom_call.1} parent=1 // pred_fallthru
      _
    // Predicated region
    $region34: #{tpu_custom_call.1} parent=1 // pred_check
      _
    $region35: #{tpu_custom_call.1} parent=1 // pred_check_branch
      %87 = sbr.rel (0) target = $region37
    $region36: #{tpu_custom_call.1} parent=1 // pred_region
      %88 = dma.done [#allocation6], 256
    $region37: #{tpu_custom_call.1} parent=1 // pred_fallthru
      _
    // Predicated region
    $region38: #{tpu_custom_call.1} parent=1 // pred_check
      _
    $region39: #{tpu_custom_call.1} parent=1 // pred_check_branch
      %90 = sbr.rel (0) target = $region41
    $region40: #{tpu_custom_call.1} parent=1 // pred_region
      %91 = dma.done [#allocation6], 8192
    $region41: #{tpu_custom_call.1} parent=1 // pred_fallthru
      _
    // Predicated region
    $region42: #{tpu_custom_call.1} parent=1 // pred_check
      _
    $region43: #{tpu_custom_call.1} parent=1 // pred_check_branch
      %93 = sbr.rel (0) target = $region45
    $region44: #{tpu_custom_call.1} parent=1 // pred_region
      %94 = dma.done [#allocation9], 8192
    $region45: #{tpu_custom_call.1} parent=1 // pred_fallthru
      _
    // Predicated region
    $region46: #{tpu_custom_call.1} parent=1 // pred_check
      _
    $region47: #{tpu_custom_call.1} parent=1 // pred_check_branch
      %96 = sbr.rel (0) target = $region49
    $region48: #{tpu_custom_call.1} parent=1 // pred_region
      %97 = dma.done [#allocation9], 16384
    $region49: #{tpu_custom_call.1} parent=1 // pred_fallthru
      _
    %v98 = vld [vmem:[#allocation5] sm:$0xff]
    %v99 = vld [vmem:[%s0] sm:$0xff]
    %v100 = vld [vmem:[#allocation7] sm:$0xff]
    %v101 = vld [vmem:[#allocation7 + $0x8] sm:$0xff]
    %v102 = vld [vmem:[#allocation7 + $0x10] sm:$0xff]
    %v103 = vld [vmem:[#allocation7 + $0x18] sm:$0xff]
    %v104 = vld [vmem:[#allocation7 + $0x20] sm:$0xff]
    %v105 = vld [vmem:[#allocation7 + $0x28] sm:$0xff]
    %v106 = vld [vmem:[#allocation7 + $0x30] sm:$0xff]
    %v107 = vld [vmem:[#allocation7 + $0x38] sm:$0xff]
    %v108 = vld [vmem:[#allocation7 + $0x40] sm:$0xff]
    %v109 = vld [vmem:[#allocation7 + $0x48] sm:$0xff]
    %v110 = vld [vmem:[#allocation7 + $0x50] sm:$0xff]
    %v111 = vld [vmem:[#allocation7 + $0x58] sm:$0xff]
    %v112 = vld [vmem:[#allocation7 + $0x60] sm:$0xff]
    %v113 = vld [vmem:[#allocation7 + $0x68] sm:$0xff]
    %v114 = vld [vmem:[#allocation7 + $0x70] sm:$0xff]
    %v115 = vld [vmem:[#allocation7 + $0x78] sm:$0xff]
    %v116 = vld [vmem:[#allocation7 + $0x80] sm:$0xff]
    %v117 = vld [vmem:[#allocation7 + $0x88] sm:$0xff]
    %v118 = vld [vmem:[#allocation7 + $0x90] sm:$0xff]
    %v119 = vld [vmem:[#allocation7 + $0x98] sm:$0xff]
    %v120 = vld [vmem:[#allocation7 + $0xa0] sm:$0xff]
    %v121 = vld [vmem:[#allocation7 + $0xa8] sm:$0xff]
    %v122 = vld [vmem:[#allocation7 + $0xb0] sm:$0xff]
    %v123 = vld [vmem:[#allocation7 + $0xb8] sm:$0xff]
    %v124 = vld [vmem:[#allocation7 + $0xc0] sm:$0xff]
    %v125 = vld [vmem:[#allocation7 + $0xc8] sm:$0xff]
    %v126 = vld [vmem:[#allocation7 + $0xd0] sm:$0xff]
    %v127 = vld [vmem:[#allocation7 + $0xd8] sm:$0xff]
    %v128 = vld [vmem:[#allocation7 + $0xe0] sm:$0xff]
    %v129 = vld [vmem:[#allocation7 + $0xe8] sm:$0xff]
    %v130 = vld [vmem:[#allocation7 + $0xf0] sm:$0xff]
    %v131 = vld [vmem:[#allocation7 + $0xf8] sm:$0xff]
    %v132 = vld [vmem:[#allocation7 + $0x100] sm:$0xff]
    %v133 = vld [vmem:[#allocation7 + $0x108] sm:$0xff]
    %v134 = vld [vmem:[#allocation7 + $0x110] sm:$0xff]
    %v135 = vld [vmem:[#allocation7 + $0x118] sm:$0xff]
    %v136 = vld [vmem:[#allocation7 + $0x120] sm:$0xff]
    %v137 = vld [vmem:[#allocation7 + $0x128] sm:$0xff]
    %v138 = vld [vmem:[#allocation7 + $0x130] sm:$0xff]
    %v139 = vld [vmem:[#allocation7 + $0x138] sm:$0xff]
    %v140 = vld [vmem:[#allocation7 + $0x140] sm:$0xff]
    %v141 = vld [vmem:[#allocation7 + $0x148] sm:$0xff]
    %v142 = vld [vmem:[#allocation7 + $0x150] sm:$0xff]
    %v143 = vld [vmem:[#allocation7 + $0x158] sm:$0xff]
    %v144 = vld [vmem:[#allocation7 + $0x160] sm:$0xff]
    %v145 = vld [vmem:[#allocation7 + $0x168] sm:$0xff]
    %v146 = vld [vmem:[#allocation7 + $0x170] sm:$0xff]
    %v147 = vld [vmem:[#allocation7 + $0x178] sm:$0xff]
    %v148 = vld [vmem:[#allocation7 + $0x180] sm:$0xff]
    %v149 = vld [vmem:[#allocation7 + $0x188] sm:$0xff]
    %v150 = vld [vmem:[#allocation7 + $0x190] sm:$0xff]
    %v151 = vld [vmem:[#allocation7 + $0x198] sm:$0xff]
    %v152 = vld [vmem:[#allocation7 + $0x1a0] sm:$0xff]
    %v153 = vld [vmem:[#allocation7 + $0x1a8] sm:$0xff]
    %v154 = vld [vmem:[#allocation7 + $0x1b0] sm:$0xff]
    %v155 = vld [vmem:[#allocation7 + $0x1b8] sm:$0xff]
    %v156 = vld [vmem:[#allocation7 + $0x1c0] sm:$0xff]
    %v157 = vld [vmem:[#allocation7 + $0x1c8] sm:$0xff]
    %v158 = vld [vmem:[#allocation7 + $0x1d0] sm:$0xff]
    %v159 = vld [vmem:[#allocation7 + $0x1d8] sm:$0xff]
    %v160 = vld [vmem:[#allocation7 + $0x1e0] sm:$0xff]
    %v161 = vld [vmem:[#allocation7 + $0x1e8] sm:$0xff]
    %v162 = vld [vmem:[#allocation7 + $0x1f0] sm:$0xff]
    %v163 = vld [vmem:[#allocation7 + $0x1f8] sm:$0xff]
    %v164 = vld [vmem:[#allocation2] sm:$0xff]
    %v165 = vld [vmem:[#allocation10] sm:$0xff]
    %v166 = vld [vmem:[#allocation10 + $0x8] sm:$0xff]
    %v167 = vld [vmem:[#allocation10 + $0x10] sm:$0xff]
    %v168 = vld [vmem:[#allocation10 + $0x18] sm:$0xff]
    %v169 = vld [vmem:[#allocation10 + $0x20] sm:$0xff]
    %v170 = vld [vmem:[#allocation10 + $0x28] sm:$0xff]
    %v171 = vld [vmem:[#allocation10 + $0x30] sm:$0xff]
    %v172 = vld [vmem:[#allocation10 + $0x38] sm:$0xff]
    %v173 = vld [vmem:[#allocation10 + $0x40] sm:$0xff]
    %v174 = vld [vmem:[#allocation10 + $0x48] sm:$0xff]
    %v175 = vld [vmem:[#allocation10 + $0x50] sm:$0xff]
    %v176 = vld [vmem:[#allocation10 + $0x58] sm:$0xff]
    %v177 = vld [vmem:[#allocation10 + $0x60] sm:$0xff]
    %v178 = vld [vmem:[#allocation10 + $0x68] sm:$0xff]
    %v179 = vld [vmem:[#allocation10 + $0x70] sm:$0xff]
    %v180 = vld [vmem:[#allocation10 + $0x78] sm:$0xff]
    %v181 = vld [vmem:[#allocation10 + $0x80] sm:$0xff]
    %v182 = vld [vmem:[#allocation10 + $0x88] sm:$0xff]
    %v183 = vld [vmem:[#allocation10 + $0x90] sm:$0xff]
    %v184 = vld [vmem:[#allocation10 + $0x98] sm:$0xff]
    %v185 = vld [vmem:[#allocation10 + $0xa0] sm:$0xff]
    %v186 = vld [vmem:[#allocation10 + $0xa8] sm:$0xff]
    %v187 = vld [vmem:[#allocation10 + $0xb0] sm:$0xff]
    %v188 = vld [vmem:[#allocation10 + $0xb8] sm:$0xff]
    %v189 = vld [vmem:[#allocation10 + $0xc0] sm:$0xff]
    %v190 = vld [vmem:[#allocation10 + $0xc8] sm:$0xff]
    %v191 = vld [vmem:[#allocation10 + $0xd0] sm:$0xff]
    %v192 = vld [vmem:[#allocation10 + $0xd8] sm:$0xff]
    %v193 = vld [vmem:[#allocation10 + $0xe0] sm:$0xff]
    %v194 = vld [vmem:[#allocation10 + $0xe8] sm:$0xff]
    %v195 = vld [vmem:[#allocation10 + $0xf0] sm:$0xff]
    %v196 = vld [vmem:[#allocation10 + $0xf8] sm:$0xff]
    %v197 = vld [vmem:[#allocation10 + $0x100] sm:$0xff]
    %v198 = vld [vmem:[#allocation10 + $0x108] sm:$0xff]
    %v199 = vld [vmem:[#allocation10 + $0x110] sm:$0xff]
    %v200 = vld [vmem:[#allocation10 + $0x118] sm:$0xff]
    %v201 = vld [vmem:[#allocation10 + $0x120] sm:$0xff]
    %v202 = vld [vmem:[#allocation10 + $0x128] sm:$0xff]
    %v203 = vld [vmem:[#allocation10 + $0x130] sm:$0xff]
    %v204 = vld [vmem:[#allocation10 + $0x138] sm:$0xff]
    %v205 = vld [vmem:[#allocation10 + $0x140] sm:$0xff]
    %v206 = vld [vmem:[#allocation10 + $0x148] sm:$0xff]
    %v207 = vld [vmem:[#allocation10 + $0x150] sm:$0xff]
    %v208 = vld [vmem:[#allocation10 + $0x158] sm:$0xff]
    %v209 = vld [vmem:[#allocation10 + $0x160] sm:$0xff]
    %v210 = vld [vmem:[#allocation10 + $0x168] sm:$0xff]
    %v211 = vld [vmem:[#allocation10 + $0x170] sm:$0xff]
    %v212 = vld [vmem:[#allocation10 + $0x178] sm:$0xff]
    %v213 = vld [vmem:[#allocation10 + $0x180] sm:$0xff]
    %v214 = vld [vmem:[#allocation10 + $0x188] sm:$0xff]
    %v215 = vld [vmem:[#allocation10 + $0x190] sm:$0xff]
    %v216 = vld [vmem:[#allocation10 + $0x198] sm:$0xff]
    %v217 = vld [vmem:[#allocation10 + $0x1a0] sm:$0xff]
    %v218 = vld [vmem:[#allocation10 + $0x1a8] sm:$0xff]
    %v219 = vld [vmem:[#allocation10 + $0x1b0] sm:$0xff]
    %v220 = vld [vmem:[#allocation10 + $0x1b8] sm:$0xff]
    %v221 = vld [vmem:[#allocation10 + $0x1c0] sm:$0xff]
    %v222 = vld [vmem:[#allocation10 + $0x1c8] sm:$0xff]
    %v223 = vld [vmem:[#allocation10 + $0x1d0] sm:$0xff]
    %v224 = vld [vmem:[#allocation10 + $0x1d8] sm:$0xff]
    %v225 = vld [vmem:[#allocation10 + $0x1e0] sm:$0xff]
    %v226 = vld [vmem:[#allocation10 + $0x1e8] sm:$0xff]
    %v227 = vld [vmem:[#allocation10 + $0x1f0] sm:$0xff]
    %v228 = vld [vmem:[#allocation10 + $0x1f8] sm:$0xff]
    %229 = vmatprep.subr.mxu0 %v166
    %230 = vmatpush1.msra.mxu0 %v165
    %231 = vmatprep.subr.mxu0 %v170
    %232 = vmatpush1.msra.mxu0 %v169
    %233 = vmatprep.subr.mxu0 %v174
    %234 = vmatpush1.msra.mxu0 %v173
    %235 = vmatprep.subr.mxu0 %v178
    %236 = vmatpush1.msra.mxu0 %v177
    %237 = vmatprep.subr.mxu0 %v182
    %238 = vmatpush1.msra.mxu0 %v181
    %239 = vmatprep.subr.mxu0 %v186
    %240 = vmatpush1.msra.mxu0 %v185
    %241 = vmatprep.subr.mxu0 %v190
    %242 = vmatpush1.msra.mxu0 %v189
    %243 = vmatprep.subr.mxu0 %v194
    %244 = vmatpush1.msra.mxu0 %v193
    %245 = vmatprep.subr.mxu0 %v198
    %246 = vmatpush1.msra.mxu0 %v197
    %247 = vmatprep.subr.mxu0 %v202
    %248 = vmatpush1.msra.mxu0 %v201
    %249 = vmatprep.subr.mxu0 %v206
    %250 = vmatpush1.msra.mxu0 %v205
    %251 = vmatprep.subr.mxu0 %v210
    %252 = vmatpush1.msra.mxu0 %v209
    %253 = vmatprep.subr.mxu0 %v214
    %254 = vmatpush1.msra.mxu0 %v213
    %255 = vmatprep.subr.mxu0 %v218
    %256 = vmatpush1.msra.mxu0 %v217
    %257 = vmatprep.subr.mxu0 %v222
    %258 = vmatpush1.msra.mxu0 %v221
    %259 = vmatprep.subr.mxu0 %v226
    %260 = vmatpush1.msra.mxu0 %v225
    %261 = vmatprep.subr.mxu0 0.0
    %262 = vmatpush1.msra.mxu0 0.0
    %263 = vmatprep.subr.mxu0 0.0
    %264 = vmatpush1.msra.mxu0 0.0
    %265 = vmatprep.subr.mxu0 0.0
    %266 = vmatpush1.msra.mxu0 0.0
    %267 = vmatprep.subr.mxu0 0.0
    %268 = vmatpush1.msra.mxu0 0.0
    %269 = vmatprep.subr.mxu0 0.0
    %270 = vmatpush1.msra.mxu0 0.0
    %271 = vmatprep.subr.mxu0 0.0
    %272 = vmatpush1.msra.mxu0 0.0
    %273 = vmatprep.subr.mxu0 0.0
    %274 = vmatpush1.msra.mxu0 0.0
    %275 = vmatprep.subr.mxu0 0.0
    %276 = vmatpush1.msra.mxu0 0.0
    %277 = vmatprep.subr.mxu0 0.0
    %278 = vmatpush1.msra.mxu0 0.0
    %279 = vmatprep.subr.mxu0 0.0
    %280 = vmatpush1.msra.mxu0 0.0
    %281 = vmatprep.subr.mxu0 0.0
    %282 = vmatpush1.msra.mxu0 0.0
    %283 = vmatprep.subr.mxu0 0.0
    %284 = vmatpush1.msra.mxu0 0.0
    %285 = vmatprep.subr.mxu0 0.0
    %286 = vmatpush1.msra.mxu0 0.0
    %287 = vmatprep.subr.mxu0 0.0
    %288 = vmatpush1.msra.mxu0 0.0
    %289 = vmatprep.subr.mxu0 0.0
    %290 = vmatpush1.msra.mxu0 0.0
    %291 = vmatprep.subr.mxu0 0.0
    %292 = vmatpush1.msra.mxu0 0.0
    %293 = vmatprep.mubr.f32.mxu0 0.0
    %294 = vmatmul.mubr.f32.gmra.mrb[0].mxu0 %v164
    %v295 = vpop.f32.mrb[0].mxu0
    %v296 = vadd.f32 0.0, %v295
    %v297 = vpop.f32.mrb[0].mxu0
    %v298 = vadd.f32 0.0, %v297
    %299 = vdwg.mxu0
    %300 = vmatprep.subr.mxu0 %v168
    %301 = vmatpush1.msra.mxu0 %v167
    %302 = vmatprep.subr.mxu0 %v172
    %303 = vmatpush1.msra.mxu0 %v171
    %304 = vmatprep.subr.mxu0 %v176
    %305 = vmatpush1.msra.mxu0 %v175
    %306 = vmatprep.subr.mxu0 %v180
    %307 = vmatpush1.msra.mxu0 %v179
    %308 = vmatprep.subr.mxu0 %v184
    %309 = vmatpush1.msra.mxu0 %v183
    %310 = vmatprep.subr.mxu0 %v188
    %311 = vmatpush1.msra.mxu0 %v187
    %312 = vmatprep.subr.mxu0 %v192
    %313 = vmatpush1.msra.mxu0 %v191
    %314 = vmatprep.subr.mxu0 %v196
    %315 = vmatpush1.msra.mxu0 %v195
    %316 = vmatprep.subr.mxu0 %v200
    %317 = vmatpush1.msra.mxu0 %v199
    %318 = vmatprep.subr.mxu0 %v204
    %319 = vmatpush1.msra.mxu0 %v203
    %320 = vmatprep.subr.mxu0 %v208
    %321 = vmatpush1.msra.mxu0 %v207
    %322 = vmatprep.subr.mxu0 %v212
    %323 = vmatpush1.msra.mxu0 %v211
    %324 = vmatprep.subr.mxu0 %v216
    %325 = vmatpush1.msra.mxu0 %v215
    %326 = vmatprep.subr.mxu0 %v220
    %327 = vmatpush1.msra.mxu0 %v219
    %328 = vmatprep.subr.mxu0 %v224
    %329 = vmatpush1.msra.mxu0 %v223
    %330 = vmatprep.subr.mxu0 %v228
    %331 = vmatpush1.msra.mxu0 %v227
    %332 = vmatprep.subr.mxu0 0.0
    %333 = vmatpush1.msra.mxu0 0.0
    %334 = vmatprep.subr.mxu0 0.0
    %335 = vmatpush1.msra.mxu0 0.0
    %336 = vmatprep.subr.mxu0 0.0
    %337 = vmatpush1.msra.mxu0 0.0
    %338 = vmatprep.subr.mxu0 0.0
    %339 = vmatpush1.msra.mxu0 0.0
    %340 = vmatprep.subr.mxu0 0.0
    %341 = vmatpush1.msra.mxu0 0.0
    %342 = vmatprep.subr.mxu0 0.0
    %343 = vmatpush1.msra.mxu0 0.0
    %344 = vmatprep.subr.mxu0 0.0
    %345 = vmatpush1.msra.mxu0 0.0
    %346 = vmatprep.subr.mxu0 0.0
    %347 = vmatpush1.msra.mxu0 0.0
    %348 = vmatprep.subr.mxu0 0.0
    %349 = vmatpush1.msra.mxu0 0.0
    %350 = vmatprep.subr.mxu0 0.0
    %351 = vmatpush1.msra.mxu0 0.0
    %352 = vmatprep.subr.mxu0 0.0
    %353 = vmatpush1.msra.mxu0 0.0
    %354 = vmatprep.subr.mxu0 0.0
    %355 = vmatpush1.msra.mxu0 0.0
    %356 = vmatprep.subr.mxu0 0.0
    %357 = vmatpush1.msra.mxu0 0.0
    %358 = vmatprep.subr.mxu0 0.0
    %359 = vmatpush1.msra.mxu0 0.0
    %360 = vmatprep.subr.mxu0 0.0
    %361 = vmatpush1.msra.mxu0 0.0
    %362 = vmatprep.subr.mxu0 0.0
    %363 = vmatpush1.msra.mxu0 0.0
    %364 = vmatprep.mubr.f32.mxu0 0.0
    %365 = vmatmul.mubr.f32.gmra.mrb[0].mxu0 %v164
    %v366 = vpop.f32.mrb[0].mxu0
    %v367 = vadd.f32 0.0, %v366
    %v368 = vpop.f32.mrb[0].mxu0
    %v369 = vadd.f32 0.0, %v368
    %370 = vdwg.mxu0
    %371 = vmatprep.subr.mxu0 %v101
    %372 = vmatpush1.msra.mxu0 %v100
    %373 = vmatprep.subr.mxu0 %v105
    %374 = vmatpush1.msra.mxu0 %v104
    %375 = vmatprep.subr.mxu0 %v109
    %376 = vmatpush1.msra.mxu0 %v108
    %377 = vmatprep.subr.mxu0 %v113
    %378 = vmatpush1.msra.mxu0 %v112
    %379 = vmatprep.subr.mxu0 %v117
    %380 = vmatpush1.msra.mxu0 %v116
    %381 = vmatprep.subr.mxu0 %v121
    %382 = vmatpush1.msra.mxu0 %v120
    %383 = vmatprep.subr.mxu0 %v125
    %384 = vmatpush1.msra.mxu0 %v124
    %385 = vmatprep.subr.mxu0 %v129
    %386 = vmatpush1.msra.mxu0 %v128
    %387 = vmatprep.subr.mxu0 %v133
    %388 = vmatpush1.msra.mxu0 %v132
    %389 = vmatprep.subr.mxu0 %v137
    %390 = vmatpush1.msra.mxu0 %v136
    %391 = vmatprep.subr.mxu0 %v141
    %392 = vmatpush1.msra.mxu0 %v140
    %393 = vmatprep.subr.mxu0 %v145
    %394 = vmatpush1.msra.mxu0 %v144
    %395 = vmatprep.subr.mxu0 %v149
    %396 = vmatpush1.msra.mxu0 %v148
    %397 = vmatprep.subr.mxu0 %v153
    %398 = vmatpush1.msra.mxu0 %v152
    %399 = vmatprep.subr.mxu0 %v157
    %400 = vmatpush1.msra.mxu0 %v156
    %401 = vmatprep.subr.mxu0 %v161
    %402 = vmatpush1.msra.mxu0 %v160
    %403 = vmatprep.subr.mxu0 0.0
    %404 = vmatpush1.msra.mxu0 0.0
    %405 = vmatprep.subr.mxu0 0.0
    %406 = vmatpush1.msra.mxu0 0.0
    %407 = vmatprep.subr.mxu0 0.0
    %408 = vmatpush1.msra.mxu0 0.0
    %409 = vmatprep.subr.mxu0 0.0
    %410 = vmatpush1.msra.mxu0 0.0
    %411 = vmatprep.subr.mxu0 0.0
    %412 = vmatpush1.msra.mxu0 0.0
    %413 = vmatprep.subr.mxu0 0.0
    %414 = vmatpush1.msra.mxu0 0.0
    %415 = vmatprep.subr.mxu0 0.0
    %416 = vmatpush1.msra.mxu0 0.0
    %417 = vmatprep.subr.mxu0 0.0
    %418 = vmatpush1.msra.mxu0 0.0
    %419 = vmatprep.subr.mxu0 0.0
    %420 = vmatpush1.msra.mxu0 0.0
    %421 = vmatprep.subr.mxu0 0.0
    %422 = vmatpush1.msra.mxu0 0.0
    %423 = vmatprep.subr.mxu0 0.0
    %424 = vmatpush1.msra.mxu0 0.0
    %425 = vmatprep.subr.mxu0 0.0
    %426 = vmatpush1.msra.mxu0 0.0
    %427 = vmatprep.subr.mxu0 0.0
    %428 = vmatpush1.msra.mxu0 0.0
    %429 = vmatprep.subr.mxu0 0.0
    %430 = vmatpush1.msra.mxu0 0.0
    %431 = vmatprep.subr.mxu0 0.0
    %432 = vmatpush1.msra.mxu0 0.0
    %433 = vmatprep.subr.mxu0 0.0
    %434 = vmatpush1.msra.mxu0 0.0
    %435 = vmatprep.mubr.f32.mxu0 0.0
    %436 = vmatmul.mubr.f32.gmra.mrb[0].mxu0 %v99
    %v437 = vpop.f32.mrb[0].mxu0
    %v438 = vadd.f32 %v296, %v437
    %v439 = vpop.f32.mrb[0].mxu0
    %v440 = vadd.f32 %v298, %v439
    %441 = vdwg.mxu0
    %442 = vmatprep.subr.mxu0 %v103
    %443 = vmatpush1.msra.mxu0 %v102
    %444 = vmatprep.subr.mxu0 %v107
    %445 = vmatpush1.msra.mxu0 %v106
    %446 = vmatprep.subr.mxu0 %v111
    %447 = vmatpush1.msra.mxu0 %v110
    %448 = vmatprep.subr.mxu0 %v115
    %449 = vmatpush1.msra.mxu0 %v114
    %450 = vmatprep.subr.mxu0 %v119
    %451 = vmatpush1.msra.mxu0 %v118
    %452 = vmatprep.subr.mxu0 %v123
    %453 = vmatpush1.msra.mxu0 %v122
    %454 = vmatprep.subr.mxu0 %v127
    %455 = vmatpush1.msra.mxu0 %v126
    %456 = vmatprep.subr.mxu0 %v131
    %457 = vmatpush1.msra.mxu0 %v130
    %458 = vmatprep.subr.mxu0 %v135
    %459 = vmatpush1.msra.mxu0 %v134
    %460 = vmatprep.subr.mxu0 %v139
    %461 = vmatpush1.msra.mxu0 %v138
    %462 = vmatprep.subr.mxu0 %v143
    %463 = vmatpush1.msra.mxu0 %v142
    %464 = vmatprep.subr.mxu0 %v147
    %465 = vmatpush1.msra.mxu0 %v146
    %466 = vmatprep.subr.mxu0 %v151
    %467 = vmatpush1.msra.mxu0 %v150
    %468 = vmatprep.subr.mxu0 %v155
    %469 = vmatpush1.msra.mxu0 %v154
    %470 = vmatprep.subr.mxu0 %v159
    %471 = vmatpush1.msra.mxu0 %v158
    %472 = vmatprep.subr.mxu0 %v163
    %473 = vmatpush1.msra.mxu0 %v162
    %474 = vmatprep.subr.mxu0 0.0
    %475 = vmatpush1.msra.mxu0 0.0
    %476 = vmatprep.subr.mxu0 0.0
    %477 = vmatpush1.msra.mxu0 0.0
    %478 = vmatprep.subr.mxu0 0.0
    %479 = vmatpush1.msra.mxu0 0.0
    %480 = vmatprep.subr.mxu0 0.0
    %481 = vmatpush1.msra.mxu0 0.0
    %482 = vmatprep.subr.mxu0 0.0
    %483 = vmatpush1.msra.mxu0 0.0
    %484 = vmatprep.subr.mxu0 0.0
    %485 = vmatpush1.msra.mxu0 0.0
    %486 = vmatprep.subr.mxu0 0.0
    %487 = vmatpush1.msra.mxu0 0.0
    %488 = vmatprep.subr.mxu0 0.0
    %489 = vmatpush1.msra.mxu0 0.0
    %490 = vmatprep.subr.mxu0 0.0
    %491 = vmatpush1.msra.mxu0 0.0
    %492 = vmatprep.subr.mxu0 0.0
    %493 = vmatpush1.msra.mxu0 0.0
    %494 = vmatprep.subr.mxu0 0.0
    %495 = vmatpush1.msra.mxu0 0.0
    %496 = vmatprep.subr.mxu0 0.0
    %497 = vmatpush1.msra.mxu0 0.0
    %498 = vmatprep.subr.mxu0 0.0
    %499 = vmatpush1.msra.mxu0 0.0
    %500 = vmatprep.subr.mxu0 0.0
    %501 = vmatpush1.msra.mxu0 0.0
    %502 = vmatprep.subr.mxu0 0.0
    %503 = vmatpush1.msra.mxu0 0.0
    %504 = vmatprep.subr.mxu0 0.0
    %505 = vmatpush1.msra.mxu0 0.0
    %506 = vmatprep.mubr.f32.mxu0 0.0
    %507 = vmatmul.mubr.f32.gmra.mrb[0].mxu0 %v99
    %v508 = vpop.f32.mrb[0].mxu0
    %v509 = vadd.f32 %v367, %v508
    %v510 = vpop.f32.mrb[0].mxu0
    %v511 = vadd.f32 %v369, %v510
    %512 = vdwg.mxu0
    %v513 = vld [vmem:[%s6] sm:$0xf]
    %v515 = vlaneseq
    %v516 = vshrl.u32 %v515, 7
    %v517 = vsub.s32 0, %v516
    %v518 = vrot.slane %v513, %v517
    %v519 = vlaneseq
    %v520 = vshrl.u32 %v519, 7
    %v521 = vsub.s32 1, %v520
    %v522 = vrot.slane %v513, %v521
    %v523 = vlaneseq
    %v524 = vshrl.u32 %v523, 7
    %v525 = vsub.s32 2, %v524
    %v526 = vrot.slane %v513, %v525
    %v527 = vlaneseq
    %v528 = vshrl.u32 %v527, 7
    %v529 = vsub.s32 3, %v528
    %v530 = vrot.slane %v513, %v529
    %v535 = vadd.f32 %v438, %v518
    %v536 = vadd.f32 %v440, %v522
    %v537 = vadd.f32 %v509, %v526
    %v538 = vadd.f32 %v511, %v530
    %v539 = vxor.u32 %v536, 2147483648
    %v540 = vmul.f32 %v539, 1.442695
    %v541 = vpow.pop %v540
    %v542 = vadd.f32 %v541, 1.0
    %v543 = vrcp.pop %v542
    %v544 = vmul.f32 1.0, %v543
    %v545 = vmul.f32 %v544, %v98
    %v546 = vxor.u32 %v535, 2147483648
    %v547 = vmul.f32 %v546, 1.442695
    %v548 = vpow.pop %v547
    %v549 = vadd.f32 %v548, 1.0
    %v550 = vrcp.pop %v549
    %v551 = vmul.f32 1.0, %v550
    %v552 = vtanh.pop %v538
    %v553 = vmul.f32 %v551, %v552
    %v554 = vadd.f32 %v545, %v553
    %v555 = vxor.u32 %v537, 2147483648
    %v556 = vmul.f32 %v555, 1.442695
    %v557 = vpow.pop %v556
    %v558 = vadd.f32 %v557, 1.0
    %v559 = vrcp.pop %v558
    %v560 = vmul.f32 1.0, %v559
    %v561 = vtanh.pop %v554
    %v562 = vmul.f32 %v560, %v561
    %563 = vst [vmem:[#allocation11] sm:$0xff] %v562
    %564 = vst [vmem:[#allocation12] sm:$0xff] %v554
    %s565 = scalar_lea.vmem [#allocation5], 8
    %v566 = vld [vmem:[%s565] sm:$0xff]
    %v567 = vld [vmem:[#allocation8] sm:$0xff]
    %v568 = vld [vmem:[#allocation8 + $0x8] sm:$0xff]
    %v569 = vld [vmem:[#allocation8 + $0x10] sm:$0xff]
    %v570 = vld [vmem:[#allocation8 + $0x18] sm:$0xff]
    %v571 = vld [vmem:[#allocation8 + $0x20] sm:$0xff]
    %v572 = vld [vmem:[#allocation8 + $0x28] sm:$0xff]
    %v573 = vld [vmem:[#allocation8 + $0x30] sm:$0xff]
    %v574 = vld [vmem:[#allocation8 + $0x38] sm:$0xff]
    %v575 = vld [vmem:[#allocation8 + $0x40] sm:$0xff]
    %v576 = vld [vmem:[#allocation8 + $0x48] sm:$0xff]
    %v577 = vld [vmem:[#allocation8 + $0x50] sm:$0xff]
    %v578 = vld [vmem:[#allocation8 + $0x58] sm:$0xff]
    %v579 = vld [vmem:[#allocation8 + $0x60] sm:$0xff]
    %v580 = vld [vmem:[#allocation8 + $0x68] sm:$0xff]
    %v581 = vld [vmem:[#allocation8 + $0x70] sm:$0xff]
    %v582 = vld [vmem:[#allocation8 + $0x78] sm:$0xff]
    %v583 = vld [vmem:[#allocation8 + $0x80] sm:$0xff]
    %v584 = vld [vmem:[#allocation8 + $0x88] sm:$0xff]
    %v585 = vld [vmem:[#allocation8 + $0x90] sm:$0xff]
    %v586 = vld [vmem:[#allocation8 + $0x98] sm:$0xff]
    %v587 = vld [vmem:[#allocation8 + $0xa0] sm:$0xff]
    %v588 = vld [vmem:[#allocation8 + $0xa8] sm:$0xff]
    %v589 = vld [vmem:[#allocation8 + $0xb0] sm:$0xff]
    %v590 = vld [vmem:[#allocation8 + $0xb8] sm:$0xff]
    %v591 = vld [vmem:[#allocation8 + $0xc0] sm:$0xff]
    %v592 = vld [vmem:[#allocation8 + $0xc8] sm:$0xff]
    %v593 = vld [vmem:[#allocation8 + $0xd0] sm:$0xff]
    %v594 = vld [vmem:[#allocation8 + $0xd8] sm:$0xff]
    %v595 = vld [vmem:[#allocation8 + $0xe0] sm:$0xff]
    %v596 = vld [vmem:[#allocation8 + $0xe8] sm:$0xff]
    %v597 = vld [vmem:[#allocation8 + $0xf0] sm:$0xff]
    %v598 = vld [vmem:[#allocation8 + $0xf8] sm:$0xff]
    %v599 = vld [vmem:[#allocation8 + $0x100] sm:$0xff]
    %v600 = vld [vmem:[#allocation8 + $0x108] sm:$0xff]
    %v601 = vld [vmem:[#allocation8 + $0x110] sm:$0xff]
    %v602 = vld [vmem:[#allocation8 + $0x118] sm:$0xff]
    %v603 = vld [vmem:[#allocation8 + $0x120] sm:$0xff]
    %v604 = vld [vmem:[#allocation8 + $0x128] sm:$0xff]
    %v605 = vld [vmem:[#allocation8 + $0x130] sm:$0xff]
    %v606 = vld [vmem:[#allocation8 + $0x138] sm:$0xff]
    %v607 = vld [vmem:[#allocation8 + $0x140] sm:$0xff]
    %v608 = vld [vmem:[#allocation8 + $0x148] sm:$0xff]
    %v609 = vld [vmem:[#allocation8 + $0x150] sm:$0xff]
    %v610 = vld [vmem:[#allocation8 + $0x158] sm:$0xff]
    %v611 = vld [vmem:[#allocation8 + $0x160] sm:$0xff]
    %v612 = vld [vmem:[#allocation8 + $0x168] sm:$0xff]
    %v613 = vld [vmem:[#allocation8 + $0x170] sm:$0xff]
    %v614 = vld [vmem:[#allocation8 + $0x178] sm:$0xff]
    %v615 = vld [vmem:[#allocation8 + $0x180] sm:$0xff]
    %v616 = vld [vmem:[#allocation8 + $0x188] sm:$0xff]
    %v617 = vld [vmem:[#allocation8 + $0x190] sm:$0xff]
    %v618 = vld [vmem:[#allocation8 + $0x198] sm:$0xff]
    %v619 = vld [vmem:[#allocation8 + $0x1a0] sm:$0xff]
    %v620 = vld [vmem:[#allocation8 + $0x1a8] sm:$0xff]
    %v621 = vld [vmem:[#allocation8 + $0x1b0] sm:$0xff]
    %v622 = vld [vmem:[#allocation8 + $0x1b8] sm:$0xff]
    %v623 = vld [vmem:[#allocation8 + $0x1c0] sm:$0xff]
    %v624 = vld [vmem:[#allocation8 + $0x1c8] sm:$0xff]
    %v625 = vld [vmem:[#allocation8 + $0x1d0] sm:$0xff]
    %v626 = vld [vmem:[#allocation8 + $0x1d8] sm:$0xff]
    %v627 = vld [vmem:[#allocation8 + $0x1e0] sm:$0xff]
    %v628 = vld [vmem:[#allocation8 + $0x1e8] sm:$0xff]
    %v629 = vld [vmem:[#allocation8 + $0x1f0] sm:$0xff]
    %v630 = vld [vmem:[#allocation8 + $0x1f8] sm:$0xff]
    %s631 = scalar_lea.vmem [#allocation2], 8
    %v632 = vld [vmem:[%s631] sm:$0xff]
    %s633 = scalar_lea.vmem [#allocation10], 512
    %v634 = vld [vmem:[%s633] sm:$0xff]
    %v635 = vld [vmem:[%s633 + $0x8] sm:$0xff]
    %v636 = vld [vmem:[%s633 + $0x10] sm:$0xff]
    %v637 = vld [vmem:[%s633 + $0x18] sm:$0xff]
    %v638 = vld [vmem:[%s633 + $0x20] sm:$0xff]
    %v639 = vld [vmem:[%s633 + $0x28] sm:$0xff]
    %v640 = vld [vmem:[%s633 + $0x30] sm:$0xff]
    %v641 = vld [vmem:[%s633 + $0x38] sm:$0xff]
    %v642 = vld [vmem:[%s633 + $0x40] sm:$0xff]
    %v643 = vld [vmem:[%s633 + $0x48] sm:$0xff]
    %v644 = vld [vmem:[%s633 + $0x50] sm:$0xff]
    %v645 = vld [vmem:[%s633 + $0x58] sm:$0xff]
    %v646 = vld [vmem:[%s633 + $0x60] sm:$0xff]
    %v647 = vld [vmem:[%s633 + $0x68] sm:$0xff]
    %v648 = vld [vmem:[%s633 + $0x70] sm:$0xff]
    %v649 = vld [vmem:[%s633 + $0x78] sm:$0xff]
    %v650 = vld [vmem:[%s633 + $0x80] sm:$0xff]
    %v651 = vld [vmem:[%s633 + $0x88] sm:$0xff]
    %v652 = vld [vmem:[%s633 + $0x90] sm:$0xff]
    %v653 = vld [vmem:[%s633 + $0x98] sm:$0xff]
    %v654 = vld [vmem:[%s633 + $0xa0] sm:$0xff]
    %v655 = vld [vmem:[%s633 + $0xa8] sm:$0xff]
    %v656 = vld [vmem:[%s633 + $0xb0] sm:$0xff]
    %v657 = vld [vmem:[%s633 + $0xb8] sm:$0xff]
    %v658 = vld [vmem:[%s633 + $0xc0] sm:$0xff]
    %v659 = vld [vmem:[%s633 + $0xc8] sm:$0xff]
    %v660 = vld [vmem:[%s633 + $0xd0] sm:$0xff]
    %v661 = vld [vmem:[%s633 + $0xd8] sm:$0xff]
    %v662 = vld [vmem:[%s633 + $0xe0] sm:$0xff]
    %v663 = vld [vmem:[%s633 + $0xe8] sm:$0xff]
    %v664 = vld [vmem:[%s633 + $0xf0] sm:$0xff]
    %v665 = vld [vmem:[%s633 + $0xf8] sm:$0xff]
    %v666 = vld [vmem:[%s633 + $0x100] sm:$0xff]
    %v667 = vld [vmem:[%s633 + $0x108] sm:$0xff]
    %v668 = vld [vmem:[%s633 + $0x110] sm:$0xff]
    %v669 = vld [vmem:[%s633 + $0x118] sm:$0xff]
    %v670 = vld [vmem:[%s633 + $0x120] sm:$0xff]
    %v671 = vld [vmem:[%s633 + $0x128] sm:$0xff]
    %v672 = vld [vmem:[%s633 + $0x130] sm:$0xff]
    %v673 = vld [vmem:[%s633 + $0x138] sm:$0xff]
    %v674 = vld [vmem:[%s633 + $0x140] sm:$0xff]
    %v675 = vld [vmem:[%s633 + $0x148] sm:$0xff]
    %v676 = vld [vmem:[%s633 + $0x150] sm:$0xff]
    %v677 = vld [vmem:[%s633 + $0x158] sm:$0xff]
    %v678 = vld [vmem:[%s633 + $0x160] sm:$0xff]
    %v679 = vld [vmem:[%s633 + $0x168] sm:$0xff]
    %v680 = vld [vmem:[%s633 + $0x170] sm:$0xff]
    %v681 = vld [vmem:[%s633 + $0x178] sm:$0xff]
    %v682 = vld [vmem:[%s633 + $0x180] sm:$0xff]
    %v683 = vld [vmem:[%s633 + $0x188] sm:$0xff]
    %v684 = vld [vmem:[%s633 + $0x190] sm:$0xff]
    %v685 = vld [vmem:[%s633 + $0x198] sm:$0xff]
    %v686 = vld [vmem:[%s633 + $0x1a0] sm:$0xff]
    %v687 = vld [vmem:[%s633 + $0x1a8] sm:$0xff]
    %v688 = vld [vmem:[%s633 + $0x1b0] sm:$0xff]
    %v689 = vld [vmem:[%s633 + $0x1b8] sm:$0xff]
    %v690 = vld [vmem:[%s633 + $0x1c0] sm:$0xff]
    %v691 = vld [vmem:[%s633 + $0x1c8] sm:$0xff]
    %v692 = vld [vmem:[%s633 + $0x1d0] sm:$0xff]
    %v693 = vld [vmem:[%s633 + $0x1d8] sm:$0xff]
    %v694 = vld [vmem:[%s633 + $0x1e0] sm:$0xff]
    %v695 = vld [vmem:[%s633 + $0x1e8] sm:$0xff]
    %v696 = vld [vmem:[%s633 + $0x1f0] sm:$0xff]
    %v697 = vld [vmem:[%s633 + $0x1f8] sm:$0xff]
    %698 = vmatprep.subr.mxu0 %v635
    %699 = vmatpush1.msra.mxu0 %v634
    %700 = vmatprep.subr.mxu0 %v639
    %701 = vmatpush1.msra.mxu0 %v638
    %702 = vmatprep.subr.mxu0 %v643
    %703 = vmatpush1.msra.mxu0 %v642
    %704 = vmatprep.subr.mxu0 %v647
    %705 = vmatpush1.msra.mxu0 %v646
    %706 = vmatprep.subr.mxu0 %v651
    %707 = vmatpush1.msra.mxu0 %v650
    %708 = vmatprep.subr.mxu0 %v655
    %709 = vmatpush1.msra.mxu0 %v654
    %710 = vmatprep.subr.mxu0 %v659
    %711 = vmatpush1.msra.mxu0 %v658
    %712 = vmatprep.subr.mxu0 %v663
    %713 = vmatpush1.msra.mxu0 %v662
    %714 = vmatprep.subr.mxu0 %v667
    %715 = vmatpush1.msra.mxu0 %v666
    %716 = vmatprep.subr.mxu0 %v671
    %717 = vmatpush1.msra.mxu0 %v670
    %718 = vmatprep.subr.mxu0 %v675
    %719 = vmatpush1.msra.mxu0 %v674
    %720 = vmatprep.subr.mxu0 %v679
    %721 = vmatpush1.msra.mxu0 %v678
    %722 = vmatprep.subr.mxu0 %v683
    %723 = vmatpush1.msra.mxu0 %v682
    %724 = vmatprep.subr.mxu0 %v687
    %725 = vmatpush1.msra.mxu0 %v686
    %726 = vmatprep.subr.mxu0 %v691
    %727 = vmatpush1.msra.mxu0 %v690
    %728 = vmatprep.subr.mxu0 %v695
    %729 = vmatpush1.msra.mxu0 %v694
    %730 = vmatprep.subr.mxu0 0.0
    %731 = vmatpush1.msra.mxu0 0.0
    %732 = vmatprep.subr.mxu0 0.0
    %733 = vmatpush1.msra.mxu0 0.0
    %734 = vmatprep.subr.mxu0 0.0
    %735 = vmatpush1.msra.mxu0 0.0
    %736 = vmatprep.subr.mxu0 0.0
    %737 = vmatpush1.msra.mxu0 0.0
    %738 = vmatprep.subr.mxu0 0.0
    %739 = vmatpush1.msra.mxu0 0.0
    %740 = vmatprep.subr.mxu0 0.0
    %741 = vmatpush1.msra.mxu0 0.0
    %742 = vmatprep.subr.mxu0 0.0
    %743 = vmatpush1.msra.mxu0 0.0
    %744 = vmatprep.subr.mxu0 0.0
    %745 = vmatpush1.msra.mxu0 0.0
    %746 = vmatprep.subr.mxu0 0.0
    %747 = vmatpush1.msra.mxu0 0.0
    %748 = vmatprep.subr.mxu0 0.0
    %749 = vmatpush1.msra.mxu0 0.0
    %750 = vmatprep.subr.mxu0 0.0
    %751 = vmatpush1.msra.mxu0 0.0
    %752 = vmatprep.subr.mxu0 0.0
    %753 = vmatpush1.msra.mxu0 0.0
    %754 = vmatprep.subr.mxu0 0.0
    %755 = vmatpush1.msra.mxu0 0.0
    %756 = vmatprep.subr.mxu0 0.0
    %757 = vmatpush1.msra.mxu0 0.0
    %758 = vmatprep.subr.mxu0 0.0
    %759 = vmatpush1.msra.mxu0 0.0
    %760 = vmatprep.subr.mxu0 0.0
    %761 = vmatpush1.msra.mxu0 0.0
    %762 = vmatprep.mubr.f32.mxu0 0.0
    %763 = vmatmul.mubr.f32.gmra.mrb[0].mxu0 %v632
    %v764 = vpop.f32.mrb[0].mxu0
    %v765 = vadd.f32 0.0, %v764
    %v766 = vpop.f32.mrb[0].mxu0
    %v767 = vadd.f32 0.0, %v766
    %768 = vdwg.mxu0
    %769 = vmatprep.subr.mxu0 %v637
    %770 = vmatpush1.msra.mxu0 %v636
    %771 = vmatprep.subr.mxu0 %v641
    %772 = vmatpush1.msra.mxu0 %v640
    %773 = vmatprep.subr.mxu0 %v645
    %774 = vmatpush1.msra.mxu0 %v644
    %775 = vmatprep.subr.mxu0 %v649
    %776 = vmatpush1.msra.mxu0 %v648
    %777 = vmatprep.subr.mxu0 %v653
    %778 = vmatpush1.msra.mxu0 %v652
    %779 = vmatprep.subr.mxu0 %v657
    %780 = vmatpush1.msra.mxu0 %v656
    %781 = vmatprep.subr.mxu0 %v661
    %782 = vmatpush1.msra.mxu0 %v660
    %783 = vmatprep.subr.mxu0 %v665
    %784 = vmatpush1.msra.mxu0 %v664
    %785 = vmatprep.subr.mxu0 %v669
    %786 = vmatpush1.msra.mxu0 %v668
    %787 = vmatprep.subr.mxu0 %v673
    %788 = vmatpush1.msra.mxu0 %v672
    %789 = vmatprep.subr.mxu0 %v677
    %790 = vmatpush1.msra.mxu0 %v676
    %791 = vmatprep.subr.mxu0 %v681
    %792 = vmatpush1.msra.mxu0 %v680
    %793 = vmatprep.subr.mxu0 %v685
    %794 = vmatpush1.msra.mxu0 %v684
    %795 = vmatprep.subr.mxu0 %v689
    %796 = vmatpush1.msra.mxu0 %v688
    %797 = vmatprep.subr.mxu0 %v693
    %798 = vmatpush1.msra.mxu0 %v692
    %799 = vmatprep.subr.mxu0 %v697
    %800 = vmatpush1.msra.mxu0 %v696
    %801 = vmatprep.subr.mxu0 0.0
    %802 = vmatpush1.msra.mxu0 0.0
    %803 = vmatprep.subr.mxu0 0.0
    %804 = vmatpush1.msra.mxu0 0.0
    %805 = vmatprep.subr.mxu0 0.0
    %806 = vmatpush1.msra.mxu0 0.0
    %807 = vmatprep.subr.mxu0 0.0
    %808 = vmatpush1.msra.mxu0 0.0
    %809 = vmatprep.subr.mxu0 0.0
    %810 = vmatpush1.msra.mxu0 0.0
    %811 = vmatprep.subr.mxu0 0.0
    %812 = vmatpush1.msra.mxu0 0.0
    %813 = vmatprep.subr.mxu0 0.0
    %814 = vmatpush1.msra.mxu0 0.0
    %815 = vmatprep.subr.mxu0 0.0
    %816 = vmatpush1.msra.mxu0 0.0
    %817 = vmatprep.subr.mxu0 0.0
    %818 = vmatpush1.msra.mxu0 0.0
    %819 = vmatprep.subr.mxu0 0.0
    %820 = vmatpush1.msra.mxu0 0.0
    %821 = vmatprep.subr.mxu0 0.0
    %822 = vmatpush1.msra.mxu0 0.0
    %823 = vmatprep.subr.mxu0 0.0
    %824 = vmatpush1.msra.mxu0 0.0
    %825 = vmatprep.subr.mxu0 0.0
    %826 = vmatpush1.msra.mxu0 0.0
    %827 = vmatprep.subr.mxu0 0.0
    %828 = vmatpush1.msra.mxu0 0.0
    %829 = vmatprep.subr.mxu0 0.0
    %830 = vmatpush1.msra.mxu0 0.0
    %831 = vmatprep.subr.mxu0 0.0
    %832 = vmatpush1.msra.mxu0 0.0
    %833 = vmatprep.mubr.f32.mxu0 0.0
    %834 = vmatmul.mubr.f32.gmra.mrb[0].mxu0 %v632
    %v835 = vpop.f32.mrb[0].mxu0
    %v836 = vadd.f32 0.0, %v835
    %v837 = vpop.f32.mrb[0].mxu0
    %v838 = vadd.f32 0.0, %v837
    %839 = vdwg.mxu0
    %840 = vmatprep.subr.mxu0 %v568
    %841 = vmatpush1.msra.mxu0 %v567
    %842 = vmatprep.subr.mxu0 %v572
    %843 = vmatpush1.msra.mxu0 %v571
    %844 = vmatprep.subr.mxu0 %v576
    %845 = vmatpush1.msra.mxu0 %v575
    %846 = vmatprep.subr.mxu0 %v580
    %847 = vmatpush1.msra.mxu0 %v579
    %848 = vmatprep.subr.mxu0 %v584
    %849 = vmatpush1.msra.mxu0 %v583
    %850 = vmatprep.subr.mxu0 %v588
    %851 = vmatpush1.msra.mxu0 %v587
    %852 = vmatprep.subr.mxu0 %v592
    %853 = vmatpush1.msra.mxu0 %v591
    %854 = vmatprep.subr.mxu0 %v596
    %855 = vmatpush1.msra.mxu0 %v595
    %856 = vmatprep.subr.mxu0 %v600
    %857 = vmatpush1.msra.mxu0 %v599
    %858 = vmatprep.subr.mxu0 %v604
    %859 = vmatpush1.msra.mxu0 %v603
    %860 = vmatprep.subr.mxu0 %v608
    %861 = vmatpush1.msra.mxu0 %v607
    %862 = vmatprep.subr.mxu0 %v612
    %863 = vmatpush1.msra.mxu0 %v611
    %864 = vmatprep.subr.mxu0 %v616
    %865 = vmatpush1.msra.mxu0 %v615
    %866 = vmatprep.subr.mxu0 %v620
    %867 = vmatpush1.msra.mxu0 %v619
    %868 = vmatprep.subr.mxu0 %v624
    %869 = vmatpush1.msra.mxu0 %v623
    %870 = vmatprep.subr.mxu0 %v628
    %871 = vmatpush1.msra.mxu0 %v627
    %872 = vmatprep.subr.mxu0 0.0
    %873 = vmatpush1.msra.mxu0 0.0
    %874 = vmatprep.subr.mxu0 0.0
    %875 = vmatpush1.msra.mxu0 0.0
    %876 = vmatprep.subr.mxu0 0.0
    %877 = vmatpush1.msra.mxu0 0.0
    %878 = vmatprep.subr.mxu0 0.0
    %879 = vmatpush1.msra.mxu0 0.0
    %880 = vmatprep.subr.mxu0 0.0
    %881 = vmatpush1.msra.mxu0 0.0
    %882 = vmatprep.subr.mxu0 0.0
    %883 = vmatpush1.msra.mxu0 0.0
    %884 = vmatprep.subr.mxu0 0.0
    %885 = vmatpush1.msra.mxu0 0.0
    %886 = vmatprep.subr.mxu0 0.0
    %887 = vmatpush1.msra.mxu0 0.0
    %888 = vmatprep.subr.mxu0 0.0
    %889 = vmatpush1.msra.mxu0 0.0
    %890 = vmatprep.subr.mxu0 0.0
    %891 = vmatpush1.msra.mxu0 0.0
    %892 = vmatprep.subr.mxu0 0.0
    %893 = vmatpush1.msra.mxu0 0.0
    %894 = vmatprep.subr.mxu0 0.0
    %895 = vmatpush1.msra.mxu0 0.0
    %896 = vmatprep.subr.mxu0 0.0
    %897 = vmatpush1.msra.mxu0 0.0
    %898 = vmatprep.subr.mxu0 0.0
    %899 = vmatpush1.msra.mxu0 0.0
    %900 = vmatprep.subr.mxu0 0.0
    %901 = vmatpush1.msra.mxu0 0.0
    %902 = vmatprep.subr.mxu0 0.0
    %903 = vmatpush1.msra.mxu0 0.0
    %904 = vmatprep.mubr.f32.mxu0 0.0
    %905 = vmatmul.mubr.f32.gmra.mrb[0].mxu0 %v562
    %v906 = vpop.f32.mrb[0].mxu0
    %v907 = vadd.f32 %v765, %v906
    %v908 = vpop.f32.mrb[0].mxu0
    %v909 = vadd.f32 %v767, %v908
    %910 = vdwg.mxu0
    %911 = vmatprep.subr.mxu0 %v570
    %912 = vmatpush1.msra.mxu0 %v569
    %913 = vmatprep.subr.mxu0 %v574
    %914 = vmatpush1.msra.mxu0 %v573
    %915 = vmatprep.subr.mxu0 %v578
    %916 = vmatpush1.msra.mxu0 %v577
    %917 = vmatprep.subr.mxu0 %v582
    %918 = vmatpush1.msra.mxu0 %v581
    %919 = vmatprep.subr.mxu0 %v586
    %920 = vmatpush1.msra.mxu0 %v585
    %921 = vmatprep.subr.mxu0 %v590
    %922 = vmatpush1.msra.mxu0 %v589
    %923 = vmatprep.subr.mxu0 %v594
    %924 = vmatpush1.msra.mxu0 %v593
    %925 = vmatprep.subr.mxu0 %v598
    %926 = vmatpush1.msra.mxu0 %v597
    %927 = vmatprep.subr.mxu0 %v602
    %928 = vmatpush1.msra.mxu0 %v601
    %929 = vmatprep.subr.mxu0 %v606
    %930 = vmatpush1.msra.mxu0 %v605
    %931 = vmatprep.subr.mxu0 %v610
    %932 = vmatpush1.msra.mxu0 %v609
    %933 = vmatprep.subr.mxu0 %v614
    %934 = vmatpush1.msra.mxu0 %v613
    %935 = vmatprep.subr.mxu0 %v618
    %936 = vmatpush1.msra.mxu0 %v617
    %937 = vmatprep.subr.mxu0 %v622
    %938 = vmatpush1.msra.mxu0 %v621
    %939 = vmatprep.subr.mxu0 %v626
    %940 = vmatpush1.msra.mxu0 %v625
    %941 = vmatprep.subr.mxu0 %v630
    %942 = vmatpush1.msra.mxu0 %v629
    %943 = vmatprep.subr.mxu0 0.0
    %944 = vmatpush1.msra.mxu0 0.0
    %945 = vmatprep.subr.mxu0 0.0
    %946 = vmatpush1.msra.mxu0 0.0
    %947 = vmatprep.subr.mxu0 0.0
    %948 = vmatpush1.msra.mxu0 0.0
    %949 = vmatprep.subr.mxu0 0.0
    %950 = vmatpush1.msra.mxu0 0.0
    %951 = vmatprep.subr.mxu0 0.0
    %952 = vmatpush1.msra.mxu0 0.0
    %953 = vmatprep.subr.mxu0 0.0
    %954 = vmatpush1.msra.mxu0 0.0
    %955 = vmatprep.subr.mxu0 0.0
    %956 = vmatpush1.msra.mxu0 0.0
    %957 = vmatprep.subr.mxu0 0.0
    %958 = vmatpush1.msra.mxu0 0.0
    %959 = vmatprep.subr.mxu0 0.0
    %960 = vmatpush1.msra.mxu0 0.0
    %961 = vmatprep.subr.mxu0 0.0
    %962 = vmatpush1.msra.mxu0 0.0
    %963 = vmatprep.subr.mxu0 0.0
    %964 = vmatpush1.msra.mxu0 0.0
    %965 = vmatprep.subr.mxu0 0.0
    %966 = vmatpush1.msra.mxu0 0.0
    %967 = vmatprep.subr.mxu0 0.0
    %968 = vmatpush1.msra.mxu0 0.0
    %969 = vmatprep.subr.mxu0 0.0
    %970 = vmatpush1.msra.mxu0 0.0
    %971 = vmatprep.subr.mxu0 0.0
    %972 = vmatpush1.msra.mxu0 0.0
    %973 = vmatprep.subr.mxu0 0.0
    %974 = vmatpush1.msra.mxu0 0.0
    %975 = vmatprep.mubr.f32.mxu0 0.0
    %976 = vmatmul.mubr.f32.gmra.mrb[0].mxu0 %v562
    %v977 = vpop.f32.mrb[0].mxu0
    %v978 = vadd.f32 %v836, %v977
    %v979 = vpop.f32.mrb[0].mxu0
    %v980 = vadd.f32 %v838, %v979
    %981 = vdwg.mxu0
    %s982 = scalar_lea.vmem %s6, 4
    %v983 = vld [vmem:[%s982] sm:$0xf]
    %v985 = vlaneseq
    %v986 = vshrl.u32 %v985, 7
    %v987 = vsub.s32 0, %v986
    %v988 = vrot.slane %v983, %v987
    %v989 = vlaneseq
    %v990 = vshrl.u32 %v989, 7
    %v991 = vsub.s32 1, %v990
    %v992 = vrot.slane %v983, %v991
    %v993 = vlaneseq
    %v994 = vshrl.u32 %v993, 7
    %v995 = vsub.s32 2, %v994
    %v996 = vrot.slane %v983, %v995
    %v997 = vlaneseq
    %v998 = vshrl.u32 %v997, 7
    %v999 = vsub.s32 3, %v998
    %v1000 = vrot.slane %v983, %v999
    %v1005 = vadd.f32 %v907, %v988
    %v1006 = vadd.f32 %v909, %v992
    %v1007 = vadd.f32 %v978, %v996
    %v1008 = vadd.f32 %v980, %v1000
    %v1009 = vxor.u32 %v1006, 2147483648
    %v1010 = vmul.f32 %v1009, 1.442695
    %v1011 = vpow.pop %v1010
    %v1012 = vadd.f32 %v1011, 1.0
    %v1013 = vrcp.pop %v1012
    %v1014 = vmul.f32 1.0, %v1013
    %v1015 = vmul.f32 %v1014, %v566
    %v1016 = vxor.u32 %v1005, 2147483648
    %v1017 = vmul.f32 %v1016, 1.442695
    %v1018 = vpow.pop %v1017
    %v1019 = vadd.f32 %v1018, 1.0
    %v1020 = vrcp.pop %v1019
    %v1021 = vmul.f32 1.0, %v1020
    %v1022 = vtanh.pop %v1008
    %v1023 = vmul.f32 %v1021, %v1022
    %v1024 = vadd.f32 %v1015, %v1023
    %v1025 = vxor.u32 %v1007, 2147483648
    %v1026 = vmul.f32 %v1025, 1.442695
    %v1027 = vpow.pop %v1026
    %v1028 = vadd.f32 %v1027, 1.0
    %v1029 = vrcp.pop %v1028
    %v1030 = vmul.f32 1.0, %v1029
    %v1031 = vtanh.pop %v1024
    %v1032 = vmul.f32 %v1030, %v1031
    %s1033 = scalar_lea.vmem [#allocation11], 8
    %1034 = vst [vmem:[%s1033] sm:$0xff] %v1032
    %s1035 = scalar_lea.vmem [#allocation12], 8
    %1036 = vst [vmem:[%s1035] sm:$0xff] %v1024
    // Predicated region
    $region50: #{tpu_custom_call.1} parent=1 // pred_check
      _
    $region51: #{tpu_custom_call.1} parent=1 // pred_check_branch
      %1038 = sbr.rel (0) target = $region53
    $region52: #{tpu_custom_call.1} parent=1 // pred_region
      %s1040 = ssub.s32 256, 256
      %1041 = vsyncadd [#allocation4], %s1040
      %s1042 = sshll.u32 [#allocation11], 4
      %s1043 = int_to_ptr.vmem [resolvable:$true] %s1042
      %1048 = dma.vmem_to_hbm [thread:$0]  %s1043, 256, %s7, [#allocation4], 128, 128, 8
    $region53: #{tpu_custom_call.1} parent=1 // pred_fallthru
      _
    // Predicated region
    $region54: #{tpu_custom_call.1} parent=1 // pred_check
      _
    $region55: #{tpu_custom_call.1} parent=1 // pred_check_branch
      %1050 = sbr.rel (0) target = $region57
    $region56: #{tpu_custom_call.1} parent=1 // pred_region
      %s1052 = ssub.s32 256, 256
      %1053 = vsyncadd [#allocation13], %s1052
      %s1054 = sshll.u32 [#allocation12], 4
      %s1055 = int_to_ptr.vmem [resolvable:$true] %s1054
      %1060 = dma.vmem_to_hbm [thread:$0]  %s1055, 256, %s8, [#allocation13], 128, 128, 8
    $region57: #{tpu_custom_call.1} parent=1 // pred_fallthru
      _
    // Predicated region
    $region58: #{tpu_custom_call.1} parent=1 // pred_check
      _
    $region59: #{tpu_custom_call.1} parent=1 // pred_check_branch
      %1062 = sbr.rel (0) target = $region61
    $region60: #{tpu_custom_call.1} parent=1 // pred_region
      %1063 = dma.done [#allocation4], 256
    $region61: #{tpu_custom_call.1} parent=1 // pred_fallthru
      _
    // Predicated region
    $region62: #{tpu_custom_call.1} parent=1 // pred_check
      _
    $region63: #{tpu_custom_call.1} parent=1 // pred_check_branch
      %1065 = sbr.rel (0) target = $region65
    $region64: #{tpu_custom_call.1} parent=1 // pred_region
      %1066 = dma.done [#allocation13], 256
    $region65: #{tpu_custom_call.1} parent=1 // pred_fallthru
      _
    %1067 = vsyncpa [#allocation3], 1
    %1068 = vsyncpa [#allocation6], 1
    %1069 = vsyncpa [#allocation9], 1
    %1070 = vsyncpa [#allocation4], 1
    %1071 = vsyncpa [#allocation13], 1

</llo_original>
